<compile_context>
chip_gen: v5e
topology: v5e:2x2
jax: 0.10.0
libtpu: 0.0.40
codegen_flags: <defaults>
</compile_context>

<pallas_src>
import jax
import jax.numpy as jnp
from jax.experimental import pallas as pl
from jax.experimental.pallas import tpu as pltpu

LANE = 128  # TPU lane width


# Layer widths of Net(n): n -> 60 -> 40 -> 30 -> 20 -> 3 -> 20 -> 30 -> 40 -> 60 -> n
def layer_dims(n):
    return [(n, 60), (60, 40), (40, 30), (30, 20), (20, 3),
            (3, 20), (20, 30), (30, 40), (40, 60), (60, n)]


def _round_up(a, m):
    return (a + m - 1) // m * m


def mlp_kernel(x_ref, w1_ref, w_ref, b_ref, o_ref):
    # x_ref : (TB, n)        f32   activations (true feature width)
    # w1_ref: (n, 128)       bf16  layer-1 weight, fan-out zero-padded
    # w_ref : (L-1, 128,128) bf16  layers 2..L, zero-padded both ways
    # b_ref : (L, 1, 128)    f32   biases, zero-padded
    # o_ref : (TB, 128)      f32   lane-dense output
    n_rest = w_ref.shape[0]

    def chain(x):
        # Layer 1: contraction over the true n; zero-padded fan-out + tanh(0)=0
        # keeps pad lanes exactly zero for the rest of the chain.
        h = jnp.dot(x.astype(jnp.bfloat16), w1_ref[...],
                    preferred_element_type=jnp.float32) + b_ref[0]
        h = jnp.tanh(h)
        for i in range(n_rest):
            h = jnp.dot(h.astype(jnp.bfloat16), w_ref[i],
                        preferred_element_type=jnp.float32) + b_ref[i + 1]
            if i < n_rest - 1:
                h = jnp.tanh(h)
        return h

    tb = x_ref.shape[0]
    if tb >= 16 and tb % 16 == 0:
        # Two independent half-tiles, both fully unrolled in one basic block:
        # the scheduler interleaves the two dependency chains so the MXU issue
        # slot stays busy while the previous layer's result drains (MRF on
        # v5e/v6e).
        half = tb // 2
        o_ref[:half, :] = chain(x_ref[:half, :]).astype(o_ref.dtype)
        o_ref[half:, :] = chain(x_ref[half:, :]).astype(o_ref.dtype)
    else:
        o_ref[...] = chain(x_ref[...]).astype(o_ref.dtype)


def pack_params(params):
    """Pack once at init (not per forward call).

    Returns (w1, w_rest, b_packed, n_out):
      w1     : (n, 128)       bf16
      w_rest : (L-1, 128,128) bf16
      b_packed: (L, 1, 128)   f32
    """
    L = len(params)
    n_in = params[0][0].shape[0]
    n_out = params[-1][0].shape[1]

    w1 = jnp.zeros((n_in, LANE), jnp.bfloat16)
    w1 = w1.at[:, :params[0][0].shape[1]].set(params[0][0].astype(jnp.bfloat16))

    w_rest = jnp.zeros((L - 1, LANE, LANE), jnp.bfloat16)
    for i, (w, _) in enumerate(params[1:]):
        w_rest = w_rest.at[i, :w.shape[0], :w.shape[1]].set(w.astype(jnp.bfloat16))

    b_packed = jnp.zeros((L, 1, LANE), jnp.float32)
    for i, (_, b) in enumerate(params):
        b_packed = b_packed.at[i, 0, :b.shape[0]].set(b)

    return w1, w_rest, b_packed, n_out


def net_forward(x, packed, *, batch_tile=2048):
    """x: (B, n) float32; packed: result of pack_params()."""
    w1, w_rest, b_packed, n_out = packed
    B, n = x.shape
    assert n == w1.shape[0], "input feature dim mismatch"
    L = w_rest.shape[0] + 1

    # Batch tile: large enough to amortize the ~0.35us/step grid overhead, but
    # aim for >= 2 tiles so v7x's two TensorCores both get work; multiple of 16
    # so the kernel can split it into two sublane-aligned halves.
    tb = min(batch_tile, max(16, _round_up((B + 1) // 2, 16)))
    b_padded = _round_up(B, tb)

    # Batch-only pad (no lane pad in HBM); no-op when B is already a multiple.
    x_in = x if b_padded == B else jnp.zeros((b_padded, n), x.dtype).at[:B].set(x)

    # VMEM: bf16 weight slabs ~320 KiB (resident) + double-buffered (tb, n) f32
    # input / (tb, 128) f32 output blocks + chain temporaries -- a few MiB even
    # at tb=2048, well under every generation's default scoped VMEM limit.
    out_padded = pl.pallas_call(
        mlp_kernel,
        out_shape=jax.ShapeDtypeStruct((b_padded, LANE), jnp.float32),
        grid=(b_padded // tb,),
        in_specs=[
            pl.BlockSpec((tb, n), lambda i: (i, 0)),                 # activations
            pl.BlockSpec((n, LANE), lambda i: (0, 0)),               # layer-1 W (resident)
            pl.BlockSpec((L - 1, LANE, LANE), lambda i: (0, 0, 0)),  # W slab (resident)
            pl.BlockSpec((L, 1, LANE), lambda i: (0, 0, 0)),         # bias slab (resident)
        ],
        out_specs=pl.BlockSpec((tb, LANE), lambda i: (i, 0)),        # lane-dense store
        compiler_params=pltpu.CompilerParams(
            dimension_semantics=("parallel",),  # shard batch tiles across TCs (v7x)
        ),
    )(x_in, w1, w_rest, b_packed)

    return out_padded[:B, :n_out]


def init_params(key, n):
    """Deterministic PyTorch-style init: U(-1/sqrt(fan_in), 1/sqrt(fan_in))."""
    params = []
    for (fan_in, fan_out) in layer_dims(n):
        key, kw, kb = jax.random.split(key, 3)
        bound = 1.0 / jnp.sqrt(float(fan_in))
        w = jax.random.uniform(kw, (fan_in, fan_out), jnp.float32, -bound, bound)
        b = jax.random.uniform(kb, (fan_out,), jnp.float32, -bound, bound)
        params.append((w, b))
    return params


def net_reference(x, params):
    h = x
    for i, (w, b) in enumerate(params):
        h = h @ w + b
        if i < len(params) - 1:
            h = jnp.tanh(h)
    return h


def net_reference_bf16(x, params):
    """Emulates the kernel's numerics: bf16 operands, f32 accumulate."""
    h = x
    for i, (w, b) in enumerate(params):
        h = jnp.dot(h.astype(jnp.bfloat16), w.astype(jnp.bfloat16),
                    preferred_element_type=jnp.float32) + b
        if i < len(params) - 1:
            h = jnp.tanh(h)
    return h


if __name__ == "__main__":
    n = 32
    batch = 8
    key = jax.random.PRNGKey(0)
    key, kx = jax.random.split(key)
    x = jax.random.normal(kx, (batch, n), jnp.float32)
    params = init_params(key, n)
    packed = pack_params(params)  # packed once, reused across forward calls

    out = net_forward(x, packed)
    out = jax.block_until_ready(out)

    ref_bf16 = net_reference_bf16(x, params)
    ref_f32 = net_reference(x, params)
    assert out.shape == (batch, n), f"bad shape {out.shape}"
    assert jnp.allclose(out, ref_bf16, atol=1e-2, rtol=1e-2), "mismatch vs bf16 reference"
    assert jnp.allclose(out, ref_f32, atol=5e-2, rtol=5e-2), "mismatch vs f32 reference"
    print("KERNEL_OK")
</pallas_src>

<mosaic_0001>
module attributes {stable_mosaic.version = 11 : i64} {
  func.func @mlp_kernel(%arg0: i32, %arg1: memref<16x32xf32, #tpu.memory_space<vmem>>, %arg2: memref<32x128xbf16, #tpu.memory_space<vmem>>, %arg3: memref<9x128x128xbf16, #tpu.memory_space<vmem>>, %arg4: memref<10x1x128xf32, #tpu.memory_space<vmem>>, %arg5: memref<16x128xf32, #tpu.memory_space<vmem>>) attributes {dimension_semantics = [#tpu.dimension_semantics<parallel>], iteration_bounds = array<i64: 1>, scalar_prefetch = 0 : i64, scratch_operands = 0 : i64, tpu.core_type = #tpu.core_type<tc>, window_params = [{transform_indices = @transform_0, window_bounds = array<i64: 16, 32>}, {pipeline_mode = #tpu.pipeline_mode<synchronous>, transform_indices = @transform_1, window_bounds = array<i64: 32, 128>}, {pipeline_mode = #tpu.pipeline_mode<synchronous>, transform_indices = @transform_2, window_bounds = array<i64: 9, 128, 128>}, {pipeline_mode = #tpu.pipeline_mode<synchronous>, transform_indices = @transform_3, window_bounds = array<i64: 10, 1, 128>}, {transform_indices = @transform_4, window_bounds = array<i64: 16, 128>}]} {
    %c0 = arith.constant 0 : index
    %c0_0 = arith.constant 0 : index
    %0 = vector.load %arg1[%c0, %c0_0] : memref<16x32xf32, #tpu.memory_space<vmem>>, vector<8x32xf32>
    %1 = arith.truncf %0 : vector<8x32xf32> to vector<8x32xbf16>
    %c0_1 = arith.constant 0 : index
    %c0_2 = arith.constant 0 : index
    %2 = vector.load %arg2[%c0_1, %c0_2] : memref<32x128xbf16, #tpu.memory_space<vmem>>, vector<32x128xbf16>
    %cst = arith.constant dense<0.000000e+00> : vector<8x128xf32>
    %3 = tpu.matmul %1, %2, %cst {dimension_numbers = #tpu.dot_dimension_numbers<[1], [0], [0], [1], [0, 0, 1, 1], [], []>} : vector<8x32xbf16>, vector<32x128xbf16>, vector<8x128xf32> -> vector<8x128xf32>
    %c0_3 = arith.constant 0 : index
    %c0_4 = arith.constant 0 : index
    %c0_5 = arith.constant 0 : index
    %4 = vector.load %arg4[%c0_3, %c0_4, %c0_5] : memref<10x1x128xf32, #tpu.memory_space<vmem>>, vector<1x1x128xf32>
    %5 = vector.shape_cast %4 : vector<1x1x128xf32> to vector<1x128xf32>
    %6 = vector.broadcast %5 : vector<1x128xf32> to vector<8x128xf32>
    %7 = arith.addf %3, %6 : vector<8x128xf32>
    %8 = math.tanh %7 : vector<8x128xf32>
    %9 = arith.truncf %8 : vector<8x128xf32> to vector<8x128xbf16>
    %c0_6 = arith.constant 0 : index
    %c0_7 = arith.constant 0 : index
    %c0_8 = arith.constant 0 : index
    %10 = vector.load %arg3[%c0_6, %c0_7, %c0_8] : memref<9x128x128xbf16, #tpu.memory_space<vmem>>, vector<1x128x128xbf16>
    %11 = vector.shape_cast %10 : vector<1x128x128xbf16> to vector<128x128xbf16>
    %cst_9 = arith.constant dense<0.000000e+00> : vector<8x128xf32>
    %12 = tpu.matmul %9, %11, %cst_9 {dimension_numbers = #tpu.dot_dimension_numbers<[1], [0], [0], [1], [0, 0, 1, 1], [], []>} : vector<8x128xbf16>, vector<128x128xbf16>, vector<8x128xf32> -> vector<8x128xf32>
    %c1 = arith.constant 1 : index
    %c0_10 = arith.constant 0 : index
    %c0_11 = arith.constant 0 : index
    %13 = vector.load %arg4[%c1, %c0_10, %c0_11] : memref<10x1x128xf32, #tpu.memory_space<vmem>>, vector<1x1x128xf32>
    %14 = vector.shape_cast %13 : vector<1x1x128xf32> to vector<1x128xf32>
    %15 = vector.broadcast %14 : vector<1x128xf32> to vector<8x128xf32>
    %16 = arith.addf %12, %15 : vector<8x128xf32>
    %17 = math.tanh %16 : vector<8x128xf32>
    %18 = arith.truncf %17 : vector<8x128xf32> to vector<8x128xbf16>
    %c1_12 = arith.constant 1 : index
    %c0_13 = arith.constant 0 : index
    %c0_14 = arith.constant 0 : index
    %19 = vector.load %arg3[%c1_12, %c0_13, %c0_14] : memref<9x128x128xbf16, #tpu.memory_space<vmem>>, vector<1x128x128xbf16>
    %20 = vector.shape_cast %19 : vector<1x128x128xbf16> to vector<128x128xbf16>
    %cst_15 = arith.constant dense<0.000000e+00> : vector<8x128xf32>
    %21 = tpu.matmul %18, %20, %cst_15 {dimension_numbers = #tpu.dot_dimension_numbers<[1], [0], [0], [1], [0, 0, 1, 1], [], []>} : vector<8x128xbf16>, vector<128x128xbf16>, vector<8x128xf32> -> vector<8x128xf32>
    %c2 = arith.constant 2 : index
    %c0_16 = arith.constant 0 : index
    %c0_17 = arith.constant 0 : index
    %22 = vector.load %arg4[%c2, %c0_16, %c0_17] : memref<10x1x128xf32, #tpu.memory_space<vmem>>, vector<1x1x128xf32>
    %23 = vector.shape_cast %22 : vector<1x1x128xf32> to vector<1x128xf32>
    %24 = vector.broadcast %23 : vector<1x128xf32> to vector<8x128xf32>
    %25 = arith.addf %21, %24 : vector<8x128xf32>
    %26 = math.tanh %25 : vector<8x128xf32>
    %27 = arith.truncf %26 : vector<8x128xf32> to vector<8x128xbf16>
    %c2_18 = arith.constant 2 : index
    %c0_19 = arith.constant 0 : index
    %c0_20 = arith.constant 0 : index
    %28 = vector.load %arg3[%c2_18, %c0_19, %c0_20] : memref<9x128x128xbf16, #tpu.memory_space<vmem>>, vector<1x128x128xbf16>
    %29 = vector.shape_cast %28 : vector<1x128x128xbf16> to vector<128x128xbf16>
    %cst_21 = arith.constant dense<0.000000e+00> : vector<8x128xf32>
    %30 = tpu.matmul %27, %29, %cst_21 {dimension_numbers = #tpu.dot_dimension_numbers<[1], [0], [0], [1], [0, 0, 1, 1], [], []>} : vector<8x128xbf16>, vector<128x128xbf16>, vector<8x128xf32> -> vector<8x128xf32>
    %c3 = arith.constant 3 : index
    %c0_22 = arith.constant 0 : index
    %c0_23 = arith.constant 0 : index
    %31 = vector.load %arg4[%c3, %c0_22, %c0_23] : memref<10x1x128xf32, #tpu.memory_space<vmem>>, vector<1x1x128xf32>
    %32 = vector.shape_cast %31 : vector<1x1x128xf32> to vector<1x128xf32>
    %33 = vector.broadcast %32 : vector<1x128xf32> to vector<8x128xf32>
    %34 = arith.addf %30, %33 : vector<8x128xf32>
    %35 = math.tanh %34 : vector<8x128xf32>
    %36 = arith.truncf %35 : vector<8x128xf32> to vector<8x128xbf16>
    %c3_24 = arith.constant 3 : index
    %c0_25 = arith.constant 0 : index
    %c0_26 = arith.constant 0 : index
    %37 = vector.load %arg3[%c3_24, %c0_25, %c0_26] : memref<9x128x128xbf16, #tpu.memory_space<vmem>>, vector<1x128x128xbf16>
    %38 = vector.shape_cast %37 : vector<1x128x128xbf16> to vector<128x128xbf16>
    %cst_27 = arith.constant dense<0.000000e+00> : vector<8x128xf32>
    %39 = tpu.matmul %36, %38, %cst_27 {dimension_numbers = #tpu.dot_dimension_numbers<[1], [0], [0], [1], [0, 0, 1, 1], [], []>} : vector<8x128xbf16>, vector<128x128xbf16>, vector<8x128xf32> -> vector<8x128xf32>
    %c4 = arith.constant 4 : index
    %c0_28 = arith.constant 0 : index
    %c0_29 = arith.constant 0 : index
    %40 = vector.load %arg4[%c4, %c0_28, %c0_29] : memref<10x1x128xf32, #tpu.memory_space<vmem>>, vector<1x1x128xf32>
    %41 = vector.shape_cast %40 : vector<1x1x128xf32> to vector<1x128xf32>
    %42 = vector.broadcast %41 : vector<1x128xf32> to vector<8x128xf32>
    %43 = arith.addf %39, %42 : vector<8x128xf32>
    %44 = math.tanh %43 : vector<8x128xf32>
    %45 = arith.truncf %44 : vector<8x128xf32> to vector<8x128xbf16>
    %c4_30 = arith.constant 4 : index
    %c0_31 = arith.constant 0 : index
    %c0_32 = arith.constant 0 : index
    %46 = vector.load %arg3[%c4_30, %c0_31, %c0_32] : memref<9x128x128xbf16, #tpu.memory_space<vmem>>, vector<1x128x128xbf16>
    %47 = vector.shape_cast %46 : vector<1x128x128xbf16> to vector<128x128xbf16>
    %cst_33 = arith.constant dense<0.000000e+00> : vector<8x128xf32>
    %48 = tpu.matmul %45, %47, %cst_33 {dimension_numbers = #tpu.dot_dimension_numbers<[1], [0], [0], [1], [0, 0, 1, 1], [], []>} : vector<8x128xbf16>, vector<128x128xbf16>, vector<8x128xf32> -> vector<8x128xf32>
    %c5 = arith.constant 5 : index
    %c0_34 = arith.constant 0 : index
    %c0_35 = arith.constant 0 : index
    %49 = vector.load %arg4[%c5, %c0_34, %c0_35] : memref<10x1x128xf32, #tpu.memory_space<vmem>>, vector<1x1x128xf32>
    %50 = vector.shape_cast %49 : vector<1x1x128xf32> to vector<1x128xf32>
    %51 = vector.broadcast %50 : vector<1x128xf32> to vector<8x128xf32>
    %52 = arith.addf %48, %51 : vector<8x128xf32>
    %53 = math.tanh %52 : vector<8x128xf32>
    %54 = arith.truncf %53 : vector<8x128xf32> to vector<8x128xbf16>
    %c5_36 = arith.constant 5 : index
    %c0_37 = arith.constant 0 : index
    %c0_38 = arith.constant 0 : index
    %55 = vector.load %arg3[%c5_36, %c0_37, %c0_38] : memref<9x128x128xbf16, #tpu.memory_space<vmem>>, vector<1x128x128xbf16>
    %56 = vector.shape_cast %55 : vector<1x128x128xbf16> to vector<128x128xbf16>
    %cst_39 = arith.constant dense<0.000000e+00> : vector<8x128xf32>
    %57 = tpu.matmul %54, %56, %cst_39 {dimension_numbers = #tpu.dot_dimension_numbers<[1], [0], [0], [1], [0, 0, 1, 1], [], []>} : vector<8x128xbf16>, vector<128x128xbf16>, vector<8x128xf32> -> vector<8x128xf32>
    %c6 = arith.constant 6 : index
    %c0_40 = arith.constant 0 : index
    %c0_41 = arith.constant 0 : index
    %58 = vector.load %arg4[%c6, %c0_40, %c0_41] : memref<10x1x128xf32, #tpu.memory_space<vmem>>, vector<1x1x128xf32>
    %59 = vector.shape_cast %58 : vector<1x1x128xf32> to vector<1x128xf32>
    %60 = vector.broadcast %59 : vector<1x128xf32> to vector<8x128xf32>
    %61 = arith.addf %57, %60 : vector<8x128xf32>
    %62 = math.tanh %61 : vector<8x128xf32>
    %63 = arith.truncf %62 : vector<8x128xf32> to vector<8x128xbf16>
    %c6_42 = arith.constant 6 : index
    %c0_43 = arith.constant 0 : index
    %c0_44 = arith.constant 0 : index
    %64 = vector.load %arg3[%c6_42, %c0_43, %c0_44] : memref<9x128x128xbf16, #tpu.memory_space<vmem>>, vector<1x128x128xbf16>
    %65 = vector.shape_cast %64 : vector<1x128x128xbf16> to vector<128x128xbf16>
    %cst_45 = arith.constant dense<0.000000e+00> : vector<8x128xf32>
    %66 = tpu.matmul %63, %65, %cst_45 {dimension_numbers = #tpu.dot_dimension_numbers<[1], [0], [0], [1], [0, 0, 1, 1], [], []>} : vector<8x128xbf16>, vector<128x128xbf16>, vector<8x128xf32> -> vector<8x128xf32>
    %c7 = arith.constant 7 : index
    %c0_46 = arith.constant 0 : index
    %c0_47 = arith.constant 0 : index
    %67 = vector.load %arg4[%c7, %c0_46, %c0_47] : memref<10x1x128xf32, #tpu.memory_space<vmem>>, vector<1x1x128xf32>
    %68 = vector.shape_cast %67 : vector<1x1x128xf32> to vector<1x128xf32>
    %69 = vector.broadcast %68 : vector<1x128xf32> to vector<8x128xf32>
    %70 = arith.addf %66, %69 : vector<8x128xf32>
    %71 = math.tanh %70 : vector<8x128xf32>
    %72 = arith.truncf %71 : vector<8x128xf32> to vector<8x128xbf16>
    %c7_48 = arith.constant 7 : index
    %c0_49 = arith.constant 0 : index
    %c0_50 = arith.constant 0 : index
    %73 = vector.load %arg3[%c7_48, %c0_49, %c0_50] : memref<9x128x128xbf16, #tpu.memory_space<vmem>>, vector<1x128x128xbf16>
    %74 = vector.shape_cast %73 : vector<1x128x128xbf16> to vector<128x128xbf16>
    %cst_51 = arith.constant dense<0.000000e+00> : vector<8x128xf32>
    %75 = tpu.matmul %72, %74, %cst_51 {dimension_numbers = #tpu.dot_dimension_numbers<[1], [0], [0], [1], [0, 0, 1, 1], [], []>} : vector<8x128xbf16>, vector<128x128xbf16>, vector<8x128xf32> -> vector<8x128xf32>
    %c8 = arith.constant 8 : index
    %c0_52 = arith.constant 0 : index
    %c0_53 = arith.constant 0 : index
    %76 = vector.load %arg4[%c8, %c0_52, %c0_53] : memref<10x1x128xf32, #tpu.memory_space<vmem>>, vector<1x1x128xf32>
    %77 = vector.shape_cast %76 : vector<1x1x128xf32> to vector<1x128xf32>
    %78 = vector.broadcast %77 : vector<1x128xf32> to vector<8x128xf32>
    %79 = arith.addf %75, %78 : vector<8x128xf32>
    %80 = math.tanh %79 : vector<8x128xf32>
    %81 = arith.truncf %80 : vector<8x128xf32> to vector<8x128xbf16>
    %c8_54 = arith.constant 8 : index
    %c0_55 = arith.constant 0 : index
    %c0_56 = arith.constant 0 : index
    %82 = vector.load %arg3[%c8_54, %c0_55, %c0_56] : memref<9x128x128xbf16, #tpu.memory_space<vmem>>, vector<1x128x128xbf16>
    %83 = vector.shape_cast %82 : vector<1x128x128xbf16> to vector<128x128xbf16>
    %cst_57 = arith.constant dense<0.000000e+00> : vector<8x128xf32>
    %84 = tpu.matmul %81, %83, %cst_57 {dimension_numbers = #tpu.dot_dimension_numbers<[1], [0], [0], [1], [0, 0, 1, 1], [], []>} : vector<8x128xbf16>, vector<128x128xbf16>, vector<8x128xf32> -> vector<8x128xf32>
    %c9 = arith.constant 9 : index
    %c0_58 = arith.constant 0 : index
    %c0_59 = arith.constant 0 : index
    %85 = vector.load %arg4[%c9, %c0_58, %c0_59] : memref<10x1x128xf32, #tpu.memory_space<vmem>>, vector<1x1x128xf32>
    %86 = vector.shape_cast %85 : vector<1x1x128xf32> to vector<1x128xf32>
    %87 = vector.broadcast %86 : vector<1x128xf32> to vector<8x128xf32>
    %88 = arith.addf %84, %87 : vector<8x128xf32>
    %c0_60 = arith.constant 0 : index
    %c0_61 = arith.constant 0 : index
    %89 = vector.load %arg5[%c0_60, %c0_61] : memref<16x128xf32, #tpu.memory_space<vmem>>, vector<8x128xf32>
    tpu.vector_store %arg5[%c0_60, %c0_61], %88 {strides = array<i32>} : memref<16x128xf32, #tpu.memory_space<vmem>>, vector<8x128xf32>,
    %c8_62 = arith.constant 8 : index
    %c0_63 = arith.constant 0 : index
    %90 = vector.load %arg1[%c8_62, %c0_63] : memref<16x32xf32, #tpu.memory_space<vmem>>, vector<8x32xf32>
    %91 = arith.truncf %90 : vector<8x32xf32> to vector<8x32xbf16>
    %c0_64 = arith.constant 0 : index
    %c0_65 = arith.constant 0 : index
    %92 = vector.load %arg2[%c0_64, %c0_65] : memref<32x128xbf16, #tpu.memory_space<vmem>>, vector<32x128xbf16>
    %cst_66 = arith.constant dense<0.000000e+00> : vector<8x128xf32>
    %93 = tpu.matmul %91, %92, %cst_66 {dimension_numbers = #tpu.dot_dimension_numbers<[1], [0], [0], [1], [0, 0, 1, 1], [], []>} : vector<8x32xbf16>, vector<32x128xbf16>, vector<8x128xf32> -> vector<8x128xf32>
    %c0_67 = arith.constant 0 : index
    %c0_68 = arith.constant 0 : index
    %c0_69 = arith.constant 0 : index
    %94 = vector.load %arg4[%c0_67, %c0_68, %c0_69] : memref<10x1x128xf32, #tpu.memory_space<vmem>>, vector<1x1x128xf32>
    %95 = vector.shape_cast %94 : vector<1x1x128xf32> to vector<1x128xf32>
    %96 = vector.broadcast %95 : vector<1x128xf32> to vector<8x128xf32>
    %97 = arith.addf %93, %96 : vector<8x128xf32>
    %98 = math.tanh %97 : vector<8x128xf32>
    %99 = arith.truncf %98 : vector<8x128xf32> to vector<8x128xbf16>
    %c0_70 = arith.constant 0 : index
    %c0_71 = arith.constant 0 : index
    %c0_72 = arith.constant 0 : index
    %100 = vector.load %arg3[%c0_70, %c0_71, %c0_72] : memref<9x128x128xbf16, #tpu.memory_space<vmem>>, vector<1x128x128xbf16>
    %101 = vector.shape_cast %100 : vector<1x128x128xbf16> to vector<128x128xbf16>
    %cst_73 = arith.constant dense<0.000000e+00> : vector<8x128xf32>
    %102 = tpu.matmul %99, %101, %cst_73 {dimension_numbers = #tpu.dot_dimension_numbers<[1], [0], [0], [1], [0, 0, 1, 1], [], []>} : vector<8x128xbf16>, vector<128x128xbf16>, vector<8x128xf32> -> vector<8x128xf32>
    %c1_74 = arith.constant 1 : index
    %c0_75 = arith.constant 0 : index
    %c0_76 = arith.constant 0 : index
    %103 = vector.load %arg4[%c1_74, %c0_75, %c0_76] : memref<10x1x128xf32, #tpu.memory_space<vmem>>, vector<1x1x128xf32>
    %104 = vector.shape_cast %103 : vector<1x1x128xf32> to vector<1x128xf32>
    %105 = vector.broadcast %104 : vector<1x128xf32> to vector<8x128xf32>
    %106 = arith.addf %102, %105 : vector<8x128xf32>
    %107 = math.tanh %106 : vector<8x128xf32>
    %108 = arith.truncf %107 : vector<8x128xf32> to vector<8x128xbf16>
    %c1_77 = arith.constant 1 : index
    %c0_78 = arith.constant 0 : index
    %c0_79 = arith.constant 0 : index
    %109 = vector.load %arg3[%c1_77, %c0_78, %c0_79] : memref<9x128x128xbf16, #tpu.memory_space<vmem>>, vector<1x128x128xbf16>
    %110 = vector.shape_cast %109 : vector<1x128x128xbf16> to vector<128x128xbf16>
    %cst_80 = arith.constant dense<0.000000e+00> : vector<8x128xf32>
    %111 = tpu.matmul %108, %110, %cst_80 {dimension_numbers = #tpu.dot_dimension_numbers<[1], [0], [0], [1], [0, 0, 1, 1], [], []>} : vector<8x128xbf16>, vector<128x128xbf16>, vector<8x128xf32> -> vector<8x128xf32>
    %c2_81 = arith.constant 2 : index
    %c0_82 = arith.constant 0 : index
    %c0_83 = arith.constant 0 : index
    %112 = vector.load %arg4[%c2_81, %c0_82, %c0_83] : memref<10x1x128xf32, #tpu.memory_space<vmem>>, vector<1x1x128xf32>
    %113 = vector.shape_cast %112 : vector<1x1x128xf32> to vector<1x128xf32>
    %114 = vector.broadcast %113 : vector<1x128xf32> to vector<8x128xf32>
    %115 = arith.addf %111, %114 : vector<8x128xf32>
    %116 = math.tanh %115 : vector<8x128xf32>
    %117 = arith.truncf %116 : vector<8x128xf32> to vector<8x128xbf16>
    %c2_84 = arith.constant 2 : index
    %c0_85 = arith.constant 0 : index
    %c0_86 = arith.constant 0 : index
    %118 = vector.load %arg3[%c2_84, %c0_85, %c0_86] : memref<9x128x128xbf16, #tpu.memory_space<vmem>>, vector<1x128x128xbf16>
    %119 = vector.shape_cast %118 : vector<1x128x128xbf16> to vector<128x128xbf16>
    %cst_87 = arith.constant dense<0.000000e+00> : vector<8x128xf32>
    %120 = tpu.matmul %117, %119, %cst_87 {dimension_numbers = #tpu.dot_dimension_numbers<[1], [0], [0], [1], [0, 0, 1, 1], [], []>} : vector<8x128xbf16>, vector<128x128xbf16>, vector<8x128xf32> -> vector<8x128xf32>
    %c3_88 = arith.constant 3 : index
    %c0_89 = arith.constant 0 : index
    %c0_90 = arith.constant 0 : index
    %121 = vector.load %arg4[%c3_88, %c0_89, %c0_90] : memref<10x1x128xf32, #tpu.memory_space<vmem>>, vector<1x1x128xf32>
    %122 = vector.shape_cast %121 : vector<1x1x128xf32> to vector<1x128xf32>
    %123 = vector.broadcast %122 : vector<1x128xf32> to vector<8x128xf32>
    %124 = arith.addf %120, %123 : vector<8x128xf32>
    %125 = math.tanh %124 : vector<8x128xf32>
    %126 = arith.truncf %125 : vector<8x128xf32> to vector<8x128xbf16>
    %c3_91 = arith.constant 3 : index
    %c0_92 = arith.constant 0 : index
    %c0_93 = arith.constant 0 : index
    %127 = vector.load %arg3[%c3_91, %c0_92, %c0_93] : memref<9x128x128xbf16, #tpu.memory_space<vmem>>, vector<1x128x128xbf16>
    %128 = vector.shape_cast %127 : vector<1x128x128xbf16> to vector<128x128xbf16>
    %cst_94 = arith.constant dense<0.000000e+00> : vector<8x128xf32>
    %129 = tpu.matmul %126, %128, %cst_94 {dimension_numbers = #tpu.dot_dimension_numbers<[1], [0], [0], [1], [0, 0, 1, 1], [], []>} : vector<8x128xbf16>, vector<128x128xbf16>, vector<8x128xf32> -> vector<8x128xf32>
    %c4_95 = arith.constant 4 : index
    %c0_96 = arith.constant 0 : index
    %c0_97 = arith.constant 0 : index
    %130 = vector.load %arg4[%c4_95, %c0_96, %c0_97] : memref<10x1x128xf32, #tpu.memory_space<vmem>>, vector<1x1x128xf32>
    %131 = vector.shape_cast %130 : vector<1x1x128xf32> to vector<1x128xf32>
    %132 = vector.broadcast %131 : vector<1x128xf32> to vector<8x128xf32>
    %133 = arith.addf %129, %132 : vector<8x128xf32>
    %134 = math.tanh %133 : vector<8x128xf32>
    %135 = arith.truncf %134 : vector<8x128xf32> to vector<8x128xbf16>
    %c4_98 = arith.constant 4 : index
    %c0_99 = arith.constant 0 : index
    %c0_100 = arith.constant 0 : index
    %136 = vector.load %arg3[%c4_98, %c0_99, %c0_100] : memref<9x128x128xbf16, #tpu.memory_space<vmem>>, vector<1x128x128xbf16>
    %137 = vector.shape_cast %136 : vector<1x128x128xbf16> to vector<128x128xbf16>
    %cst_101 = arith.constant dense<0.000000e+00> : vector<8x128xf32>
    %138 = tpu.matmul %135, %137, %cst_101 {dimension_numbers = #tpu.dot_dimension_numbers<[1], [0], [0], [1], [0, 0, 1, 1], [], []>} : vector<8x128xbf16>, vector<128x128xbf16>, vector<8x128xf32> -> vector<8x128xf32>
    %c5_102 = arith.constant 5 : index
    %c0_103 = arith.constant 0 : index
    %c0_104 = arith.constant 0 : index
    %139 = vector.load %arg4[%c5_102, %c0_103, %c0_104] : memref<10x1x128xf32, #tpu.memory_space<vmem>>, vector<1x1x128xf32>
    %140 = vector.shape_cast %139 : vector<1x1x128xf32> to vector<1x128xf32>
    %141 = vector.broadcast %140 : vector<1x128xf32> to vector<8x128xf32>
    %142 = arith.addf %138, %141 : vector<8x128xf32>
    %143 = math.tanh %142 : vector<8x128xf32>
    %144 = arith.truncf %143 : vector<8x128xf32> to vector<8x128xbf16>
    %c5_105 = arith.constant 5 : index
    %c0_106 = arith.constant 0 : index
    %c0_107 = arith.constant 0 : index
    %145 = vector.load %arg3[%c5_105, %c0_106, %c0_107] : memref<9x128x128xbf16, #tpu.memory_space<vmem>>, vector<1x128x128xbf16>
    %146 = vector.shape_cast %145 : vector<1x128x128xbf16> to vector<128x128xbf16>
    %cst_108 = arith.constant dense<0.000000e+00> : vector<8x128xf32>
    %147 = tpu.matmul %144, %146, %cst_108 {dimension_numbers = #tpu.dot_dimension_numbers<[1], [0], [0], [1], [0, 0, 1, 1], [], []>} : vector<8x128xbf16>, vector<128x128xbf16>, vector<8x128xf32> -> vector<8x128xf32>
    %c6_109 = arith.constant 6 : index
    %c0_110 = arith.constant 0 : index
    %c0_111 = arith.constant 0 : index
    %148 = vector.load %arg4[%c6_109, %c0_110, %c0_111] : memref<10x1x128xf32, #tpu.memory_space<vmem>>, vector<1x1x128xf32>
    %149 = vector.shape_cast %148 : vector<1x1x128xf32> to vector<1x128xf32>
    %150 = vector.broadcast %149 : vector<1x128xf32> to vector<8x128xf32>
    %151 = arith.addf %147, %150 : vector<8x128xf32>
    %152 = math.tanh %151 : vector<8x128xf32>
    %153 = arith.truncf %152 : vector<8x128xf32> to vector<8x128xbf16>
    %c6_112 = arith.constant 6 : index
    %c0_113 = arith.constant 0 : index
    %c0_114 = arith.constant 0 : index
    %154 = vector.load %arg3[%c6_112, %c0_113, %c0_114] : memref<9x128x128xbf16, #tpu.memory_space<vmem>>, vector<1x128x128xbf16>
    %155 = vector.shape_cast %154 : vector<1x128x128xbf16> to vector<128x128xbf16>
    %cst_115 = arith.constant dense<0.000000e+00> : vector<8x128xf32>
    %156 = tpu.matmul %153, %155, %cst_115 {dimension_numbers = #tpu.dot_dimension_numbers<[1], [0], [0], [1], [0, 0, 1, 1], [], []>} : vector<8x128xbf16>, vector<128x128xbf16>, vector<8x128xf32> -> vector<8x128xf32>
    %c7_116 = arith.constant 7 : index
    %c0_117 = arith.constant 0 : index
    %c0_118 = arith.constant 0 : index
    %157 = vector.load %arg4[%c7_116, %c0_117, %c0_118] : memref<10x1x128xf32, #tpu.memory_space<vmem>>, vector<1x1x128xf32>
    %158 = vector.shape_cast %157 : vector<1x1x128xf32> to vector<1x128xf32>
    %159 = vector.broadcast %158 : vector<1x128xf32> to vector<8x128xf32>
    %160 = arith.addf %156, %159 : vector<8x128xf32>
    %161 = math.tanh %160 : vector<8x128xf32>
    %162 = arith.truncf %161 : vector<8x128xf32> to vector<8x128xbf16>
    %c7_119 = arith.constant 7 : index
    %c0_120 = arith.constant 0 : index
    %c0_121 = arith.constant 0 : index
    %163 = vector.load %arg3[%c7_119, %c0_120, %c0_121] : memref<9x128x128xbf16, #tpu.memory_space<vmem>>, vector<1x128x128xbf16>
    %164 = vector.shape_cast %163 : vector<1x128x128xbf16> to vector<128x128xbf16>
    %cst_122 = arith.constant dense<0.000000e+00> : vector<8x128xf32>
    %165 = tpu.matmul %162, %164, %cst_122 {dimension_numbers = #tpu.dot_dimension_numbers<[1], [0], [0], [1], [0, 0, 1, 1], [], []>} : vector<8x128xbf16>, vector<128x128xbf16>, vector<8x128xf32> -> vector<8x128xf32>
    %c8_123 = arith.constant 8 : index
    %c0_124 = arith.constant 0 : index
    %c0_125 = arith.constant 0 : index
    %166 = vector.load %arg4[%c8_123, %c0_124, %c0_125] : memref<10x1x128xf32, #tpu.memory_space<vmem>>, vector<1x1x128xf32>
    %167 = vector.shape_cast %166 : vector<1x1x128xf32> to vector<1x128xf32>
    %168 = vector.broadcast %167 : vector<1x128xf32> to vector<8x128xf32>
    %169 = arith.addf %165, %168 : vector<8x128xf32>
    %170 = math.tanh %169 : vector<8x128xf32>
    %171 = arith.truncf %170 : vector<8x128xf32> to vector<8x128xbf16>
    %c8_126 = arith.constant 8 : index
    %c0_127 = arith.constant 0 : index
    %c0_128 = arith.constant 0 : index
    %172 = vector.load %arg3[%c8_126, %c0_127, %c0_128] : memref<9x128x128xbf16, #tpu.memory_space<vmem>>, vector<1x128x128xbf16>
    %173 = vector.shape_cast %172 : vector<1x128x128xbf16> to vector<128x128xbf16>
    %cst_129 = arith.constant dense<0.000000e+00> : vector<8x128xf32>
    %174 = tpu.matmul %171, %173, %cst_129 {dimension_numbers = #tpu.dot_dimension_numbers<[1], [0], [0], [1], [0, 0, 1, 1], [], []>} : vector<8x128xbf16>, vector<128x128xbf16>, vector<8x128xf32> -> vector<8x128xf32>
    %c9_130 = arith.constant 9 : index
    %c0_131 = arith.constant 0 : index
    %c0_132 = arith.constant 0 : index
    %175 = vector.load %arg4[%c9_130, %c0_131, %c0_132] : memref<10x1x128xf32, #tpu.memory_space<vmem>>, vector<1x1x128xf32>
    %176 = vector.shape_cast %175 : vector<1x1x128xf32> to vector<1x128xf32>
    %177 = vector.broadcast %176 : vector<1x128xf32> to vector<8x128xf32>
    %178 = arith.addf %174, %177 : vector<8x128xf32>
    %c8_133 = arith.constant 8 : index
    %c0_134 = arith.constant 0 : index
    %179 = vector.load %arg5[%c8_133, %c0_134] : memref<16x128xf32, #tpu.memory_space<vmem>>, vector<8x128xf32>
    tpu.vector_store %arg5[%c8_133, %c0_134], %178 {strides = array<i32>} : memref<16x128xf32, #tpu.memory_space<vmem>>, vector<8x128xf32>,
    return
  }
  func.func @transform_0(%arg0: i32) -> (i32, i32) {
    %c0_i32 = arith.constant 0 : i32
    %c0_i32_0 = arith.constant 0 : i32
    return %arg0, %c0_i32 : i32, i32
  }
  func.func @transform_1(%arg0: i32) -> (i32, i32) {
    %c0_i32 = arith.constant 0 : i32
    %c0_i32_0 = arith.constant 0 : i32
    %c0_i32_1 = arith.constant 0 : i32
    return %c0_i32, %c0_i32_0 : i32, i32
  }
  func.func @transform_2(%arg0: i32) -> (i32, i32, i32) {
    %c0_i32 = arith.constant 0 : i32
    %c0_i32_0 = arith.constant 0 : i32
    %c0_i32_1 = arith.constant 0 : i32
    %c0_i32_2 = arith.constant 0 : i32
    return %c0_i32, %c0_i32_0, %c0_i32_1 : i32, i32, i32
  }
  func.func @transform_3(%arg0: i32) -> (i32, i32, i32) {
    %c0_i32 = arith.constant 0 : i32
    %c0_i32_0 = arith.constant 0 : i32
    %c0_i32_1 = arith.constant 0 : i32
    %c0_i32_2 = arith.constant 0 : i32
    return %c0_i32, %c0_i32_0, %c0_i32_1 : i32, i32, i32
  }
  func.func @transform_4(%arg0: i32) -> (i32, i32) {
    %c0_i32 = arith.constant 0 : i32
    %c0_i32_0 = arith.constant 0 : i32
    return %arg0, %c0_i32 : i32, i32
  }
}

</mosaic_0001>

<llo_original>
// kernel: tpu_custom_call.1
$region0: #{tpu_custom_call.1}
  #allocation0 [shape = 'u32[]', space=smem, size = 0x4, offset = 0x4, fixed_abs, tag = 'smem constant byte address 0x4 - core index']
  #allocation1 [shape = 'u32[72,128]{1,0:T(1,128)}', space=vmem, size = 0x9000, scoped, tag = 'internal scratch']
  %s0 = inlined_call_operand.hbm [shape: f32[16,32], index: 0, kind: input, shape index: {}]
  %s1 = inlined_call_operand.hbm [shape: bf16[32,128], index: 1, kind: input, shape index: {}]
  %s2 = inlined_call_operand.hbm [shape: bf16[9,128,128], index: 2, kind: input, shape index: {}]
  %s3 = inlined_call_operand.hbm [shape: f32[10,1,128], index: 3, kind: input, shape index: {}]
  %s4 = inlined_call_operand.hbm [shape: f32[16,128], index: 4, kind: output, shape index: {}]
  %s5 = sld [smem:[#allocation0]]
  $region42: #{tpu_custom_call.1} parent=0
    _
  %s7 = ssub.s32 1, %s5
  %s8 = scalar_select 0, %s7, %s5
  $region1: #{tpu_custom_call.1} parent=0
    #allocation2 [shape = 'u8[8192]{0}', space=vmem, size = 0x2000, scoped, tag = 'input window, operand 0, single buffered']
    #allocation3 [shape = 's32[1]{0}', space=sflag, size = 0x4, scoped, tag = 'scoped memory for tpu_custom_call.1']
    #allocation4 [shape = 's32[1]{0}', space=sflag, size = 0x4, scoped, tag = 'scoped memory for tpu_custom_call.1']
    #allocation5 [shape = 'u8[8192]{0}', space=vmem, size = 0x2000, scoped, tag = 'input window, operand 1, single buffered']
    #allocation6 [shape = 's32[1]{0}', space=sflag, size = 0x4, scoped, tag = 'scoped memory for tpu_custom_call.1']
    #allocation7 [shape = 'u8[294912]{0}', space=vmem, size = 0x48000, scoped, tag = 'input window, operand 2, single buffered']
    #allocation8 [shape = 'u8[5120]{0}', space=vmem, size = 0x1400, scoped, tag = 'input window, operand 3, single buffered']
    #allocation9 [shape = 's32[1]{0}', space=sflag, size = 0x4, scoped, tag = 'scoped memory for tpu_custom_call.1']
    #allocation10 [shape = 'u8[8192]{0}', space=vmem, size = 0x2000, scoped, tag = 'output window, operand 0, single buffered']
    %9 = vsyncpa [#allocation3], 0
    %10 = vsyncpa [#allocation6], 0
    %11 = vsyncpa [#allocation9], 0
    %12 = vsyncpa [#allocation4], 0
    // Predicated region
    $region2: #{tpu_custom_call.1} parent=1 // pred_check
      _
    $region3: #{tpu_custom_call.1} parent=1 // pred_check_branch
      %14 = sbr.rel (0) target = $region5
    $region4: #{tpu_custom_call.1} parent=1 // pred_region
      %16 = vsyncadd [#allocation3], 0
      %s17 = sshll.u32 %s0, 4
      %s18 = int_to_ptr.hbm [resolvable:$true] %s17
      %s19 = sshll.u32 [#allocation2], 4
      %s20 = int_to_ptr.vmem [resolvable:$true] %s19
      %25 = dma.hbm_to_vmem [thread:$0]  %s18, 256, %s20, [#allocation3], 128, 128, 8
    $region5: #{tpu_custom_call.1} parent=1 // pred_fallthru
      _
    // Predicated region
    $region6: #{tpu_custom_call.1} parent=1 // pred_check
      _
    $region7: #{tpu_custom_call.1} parent=1 // pred_check_branch
      %27 = sbr.rel (0) target = $region9
    $region8: #{tpu_custom_call.1} parent=1 // pred_region
      %29 = vsyncadd [#allocation6], 0
      %s30 = sshll.u32 %s1, 4
      %s31 = int_to_ptr.hbm [resolvable:$true] %s30
      %s32 = sshll.u32 [#allocation5], 4
      %s33 = int_to_ptr.vmem [resolvable:$true] %s32
      %38 = dma.hbm_to_vmem [thread:$0]  %s31, 256, %s33, [#allocation6], 64, 64, 4
    $region9: #{tpu_custom_call.1} parent=1 // pred_fallthru
      _
    // Predicated region
    $region10: #{tpu_custom_call.1} parent=1 // pred_check
      _
    $region11: #{tpu_custom_call.1} parent=1 // pred_check_branch
      %40 = sbr.rel (0) target = $region13
    $region12: #{tpu_custom_call.1} parent=1 // pred_region
      %42 = vsyncadd [#allocation6], 0
      %s43 = sshll.u32 %s2, 4
      %s44 = int_to_ptr.hbm [resolvable:$true] %s43
      %s45 = sshll.u32 [#allocation7], 4
      %s46 = int_to_ptr.vmem [resolvable:$true] %s45
      %51 = dma.hbm_to_vmem [thread:$0]  %s44, 9216, %s46, [#allocation6], 64, 64, 4
    $region13: #{tpu_custom_call.1} parent=1 // pred_fallthru
      _
    // Predicated region
    $region14: #{tpu_custom_call.1} parent=1 // pred_check
      _
    $region15: #{tpu_custom_call.1} parent=1 // pred_check_branch
      %53 = sbr.rel (0) target = $region17
    $region16: #{tpu_custom_call.1} parent=1 // pred_region
      %55 = vsyncadd [#allocation9], 0
      %s56 = sshll.u32 %s3, 4
      %s57 = int_to_ptr.hbm [resolvable:$true] %s56
      %s58 = sshll.u32 [#allocation8], 4
      %s59 = int_to_ptr.vmem [resolvable:$true] %s58
      %64 = dma.hbm_to_vmem [thread:$0]  %s57, 160, %s59, [#allocation9], 16, 16, 1
    $region17: #{tpu_custom_call.1} parent=1 // pred_fallthru
      _
    // Predicated region
    $region18: #{tpu_custom_call.1} parent=1 // pred_check
      _
    $region19: #{tpu_custom_call.1} parent=1 // pred_check_branch
      %66 = sbr.rel (0) target = $region21
    $region20: #{tpu_custom_call.1} parent=1 // pred_region
      %68 = dma.done [#allocation3], 256
    $region21: #{tpu_custom_call.1} parent=1 // pred_fallthru
      _
    // Predicated region
    $region22: #{tpu_custom_call.1} parent=1 // pred_check
      _
    $region23: #{tpu_custom_call.1} parent=1 // pred_check_branch
      %70 = sbr.rel (0) target = $region25
    $region24: #{tpu_custom_call.1} parent=1 // pred_region
      %72 = dma.done [#allocation6], 256
    $region25: #{tpu_custom_call.1} parent=1 // pred_fallthru
      _
    // Predicated region
    $region26: #{tpu_custom_call.1} parent=1 // pred_check
      _
    $region27: #{tpu_custom_call.1} parent=1 // pred_check_branch
      %74 = sbr.rel (0) target = $region29
    $region28: #{tpu_custom_call.1} parent=1 // pred_region
      %76 = dma.done [#allocation6], 9216
    $region29: #{tpu_custom_call.1} parent=1 // pred_fallthru
      _
    // Predicated region
    $region30: #{tpu_custom_call.1} parent=1 // pred_check
      _
    $region31: #{tpu_custom_call.1} parent=1 // pred_check_branch
      %78 = sbr.rel (0) target = $region33
    $region32: #{tpu_custom_call.1} parent=1 // pred_region
      %80 = dma.done [#allocation9], 160
    $region33: #{tpu_custom_call.1} parent=1 // pred_fallthru
      _
    %v82 = vld [vmem:[#allocation2] sm:$0xff]
    %v83 = vpack.c.bf16 %v82, %v82
    %v84 = vld [vmem:[#allocation5] sm:$0xf]
    %v85 = vld [vmem:[#allocation5 + $0x4] sm:$0xf]
    %v86 = vld [vmem:[#allocation5 + $0x8] sm:$0xf]
    %v87 = vld [vmem:[#allocation5 + $0xc] sm:$0xf]
    %v88 = vld [vmem:[#allocation8] sm:$0x1]
    %v90 = vperm.slane %v88, 0
    %v96 = vunpack.c.l.b16 %v84
    %v97 = vunpack.c.l.b16 %v85
    %v98 = vunpack.c.l.b16 %v86
    %v99 = vunpack.c.l.b16 %v87
    %v100 = vpack.c.b16 %v97, %v96
    %v101 = vpack.c.b16 %v99, %v98
    %vm104 = vcmask 261120
    %v106 = vsel %vm104, %v83, 0
    %108 = vmatpush.bf16.msra.mxu0 0
    %109 = vmatpush.bf16.msra.mxu0 0
    %110 = vmatpush.bf16.msra.mxu0 0
    %111 = vmatpush.bf16.msra.mxu0 0
    %112 = vmatpush.bf16.msra.mxu0 0
    %113 = vmatpush.bf16.msra.mxu0 0
    %114 = vmatpush.bf16.msra.mxu0 %v101
    %115 = vmatpush.bf16.msra.mxu0 %v100
    %116 = vmatmul.bf16.gmra.mxu0 %v106
    %v117 = vpop.f32.mrf.mxu0
    %v118 = vadd.f32 %v90, %v117
    %v119 = vpop.f32.mrf.mxu0
    %120 = vdwg.mxu0
    %v121 = vtanh.pop %v118
    %v122 = vpack.c.bf16 %v121, %v121
    %v123 = vld [vmem:[#allocation7] sm:$0xf]
    %v124 = vld [vmem:[#allocation7 + $0x4] sm:$0xf]
    %v125 = vld [vmem:[#allocation7 + $0x8] sm:$0xf]
    %v126 = vld [vmem:[#allocation7 + $0xc] sm:$0xf]
    %v127 = vld [vmem:[#allocation7 + $0x10] sm:$0xf]
    %v128 = vld [vmem:[#allocation7 + $0x14] sm:$0xf]
    %v129 = vld [vmem:[#allocation7 + $0x18] sm:$0xf]
    %v130 = vld [vmem:[#allocation7 + $0x1c] sm:$0xf]
    %v131 = vld [vmem:[#allocation7 + $0x20] sm:$0xf]
    %v132 = vld [vmem:[#allocation7 + $0x24] sm:$0xf]
    %v133 = vld [vmem:[#allocation7 + $0x28] sm:$0xf]
    %v134 = vld [vmem:[#allocation7 + $0x2c] sm:$0xf]
    %v135 = vld [vmem:[#allocation7 + $0x30] sm:$0xf]
    %v136 = vld [vmem:[#allocation7 + $0x34] sm:$0xf]
    %v137 = vld [vmem:[#allocation7 + $0x38] sm:$0xf]
    %v138 = vld [vmem:[#allocation7 + $0x3c] sm:$0xf]
    %s139 = scalar_lea.vmem [#allocation8], 1
    %v140 = vld [vmem:[%s139] sm:$0x1]
    %v142 = vperm.slane %v140, 0
    %v160 = vunpack.c.l.b16 %v123
    %v161 = vunpack.c.l.b16 %v124
    %v162 = vunpack.c.l.b16 %v125
    %v163 = vunpack.c.l.b16 %v126
    %v164 = vunpack.c.l.b16 %v127
    %v165 = vunpack.c.l.b16 %v128
    %v166 = vunpack.c.l.b16 %v129
    %v167 = vunpack.c.l.b16 %v130
    %v168 = vunpack.c.l.b16 %v131
    %v169 = vunpack.c.l.b16 %v132
    %v170 = vunpack.c.l.b16 %v133
    %v171 = vunpack.c.l.b16 %v134
    %v172 = vunpack.c.l.b16 %v135
    %v173 = vunpack.c.l.b16 %v136
    %v174 = vunpack.c.l.b16 %v137
    %v175 = vunpack.c.l.b16 %v138
    %v176 = vpack.c.b16 %v161, %v160
    %v177 = vpack.c.b16 %v163, %v162
    %v178 = vpack.c.b16 %v165, %v164
    %v179 = vpack.c.b16 %v167, %v166
    %v180 = vpack.c.b16 %v169, %v168
    %v181 = vpack.c.b16 %v171, %v170
    %v182 = vpack.c.b16 %v173, %v172
    %v183 = vpack.c.b16 %v175, %v174
    %192 = vmatpush.bf16.msra.mxu0 %v183
    %193 = vmatpush.bf16.msra.mxu0 %v182
    %194 = vmatpush.bf16.msra.mxu0 %v181
    %195 = vmatpush.bf16.msra.mxu0 %v180
    %196 = vmatpush.bf16.msra.mxu0 %v179
    %197 = vmatpush.bf16.msra.mxu0 %v178
    %198 = vmatpush.bf16.msra.mxu0 %v177
    %199 = vmatpush.bf16.msra.mxu0 %v176
    %200 = vmatmul.bf16.gmra.mxu0 %v122
    %v201 = vpop.f32.mrf.mxu0
    %v202 = vadd.f32 %v142, %v201
    %v203 = vpop.f32.mrf.mxu0
    %204 = vdwg.mxu0
    %v205 = vtanh.pop %v202
    %v206 = vpack.c.bf16 %v205, %v205
    %s207 = scalar_lea.vmem [#allocation7], 64
    %v208 = vld [vmem:[%s207] sm:$0xf]
    %v209 = vld [vmem:[%s207 + $0x4] sm:$0xf]
    %v210 = vld [vmem:[%s207 + $0x8] sm:$0xf]
    %v211 = vld [vmem:[%s207 + $0xc] sm:$0xf]
    %v212 = vld [vmem:[%s207 + $0x10] sm:$0xf]
    %v213 = vld [vmem:[%s207 + $0x14] sm:$0xf]
    %v214 = vld [vmem:[%s207 + $0x18] sm:$0xf]
    %v215 = vld [vmem:[%s207 + $0x1c] sm:$0xf]
    %v216 = vld [vmem:[%s207 + $0x20] sm:$0xf]
    %v217 = vld [vmem:[%s207 + $0x24] sm:$0xf]
    %v218 = vld [vmem:[%s207 + $0x28] sm:$0xf]
    %v219 = vld [vmem:[%s207 + $0x2c] sm:$0xf]
    %v220 = vld [vmem:[%s207 + $0x30] sm:$0xf]
    %v221 = vld [vmem:[%s207 + $0x34] sm:$0xf]
    %v222 = vld [vmem:[%s207 + $0x38] sm:$0xf]
    %v223 = vld [vmem:[%s207 + $0x3c] sm:$0xf]
    %s224 = scalar_lea.vmem [#allocation8], 2
    %v225 = vld [vmem:[%s224] sm:$0x1]
    %v227 = vperm.slane %v225, 0
    %v245 = vunpack.c.l.b16 %v208
    %v246 = vunpack.c.l.b16 %v209
    %v247 = vunpack.c.l.b16 %v210
    %v248 = vunpack.c.l.b16 %v211
    %v249 = vunpack.c.l.b16 %v212
    %v250 = vunpack.c.l.b16 %v213
    %v251 = vunpack.c.l.b16 %v214
    %v252 = vunpack.c.l.b16 %v215
    %v253 = vunpack.c.l.b16 %v216
    %v254 = vunpack.c.l.b16 %v217
    %v255 = vunpack.c.l.b16 %v218
    %v256 = vunpack.c.l.b16 %v219
    %v257 = vunpack.c.l.b16 %v220
    %v258 = vunpack.c.l.b16 %v221
    %v259 = vunpack.c.l.b16 %v222
    %v260 = vunpack.c.l.b16 %v223
    %v261 = vpack.c.b16 %v246, %v245
    %v262 = vpack.c.b16 %v248, %v247
    %v263 = vpack.c.b16 %v250, %v249
    %v264 = vpack.c.b16 %v252, %v251
    %v265 = vpack.c.b16 %v254, %v253
    %v266 = vpack.c.b16 %v256, %v255
    %v267 = vpack.c.b16 %v258, %v257
    %v268 = vpack.c.b16 %v260, %v259
    %277 = vmatpush.bf16.msra.mxu0 %v268
    %278 = vmatpush.bf16.msra.mxu0 %v267
    %279 = vmatpush.bf16.msra.mxu0 %v266
    %280 = vmatpush.bf16.msra.mxu0 %v265
    %281 = vmatpush.bf16.msra.mxu0 %v264
    %282 = vmatpush.bf16.msra.mxu0 %v263
    %283 = vmatpush.bf16.msra.mxu0 %v262
    %284 = vmatpush.bf16.msra.mxu0 %v261
    %285 = vmatmul.bf16.gmra.mxu0 %v206
    %v286 = vpop.f32.mrf.mxu0
    %v287 = vadd.f32 %v227, %v286
    %v288 = vpop.f32.mrf.mxu0
    %289 = vdwg.mxu0
    %v290 = vtanh.pop %v287
    %v291 = vpack.c.bf16 %v290, %v290
    %s292 = scalar_lea.vmem [#allocation7], 128
    %v293 = vld [vmem:[%s292] sm:$0xf]
    %v294 = vld [vmem:[%s292 + $0x4] sm:$0xf]
    %v295 = vld [vmem:[%s292 + $0x8] sm:$0xf]
    %v296 = vld [vmem:[%s292 + $0xc] sm:$0xf]
    %v297 = vld [vmem:[%s292 + $0x10] sm:$0xf]
    %v298 = vld [vmem:[%s292 + $0x14] sm:$0xf]
    %v299 = vld [vmem:[%s292 + $0x18] sm:$0xf]
    %v300 = vld [vmem:[%s292 + $0x1c] sm:$0xf]
    %v301 = vld [vmem:[%s292 + $0x20] sm:$0xf]
    %v302 = vld [vmem:[%s292 + $0x24] sm:$0xf]
    %v303 = vld [vmem:[%s292 + $0x28] sm:$0xf]
    %v304 = vld [vmem:[%s292 + $0x2c] sm:$0xf]
    %v305 = vld [vmem:[%s292 + $0x30] sm:$0xf]
    %v306 = vld [vmem:[%s292 + $0x34] sm:$0xf]
    %v307 = vld [vmem:[%s292 + $0x38] sm:$0xf]
    %v308 = vld [vmem:[%s292 + $0x3c] sm:$0xf]
    %s309 = scalar_lea.vmem [#allocation8], 3
    %v310 = vld [vmem:[%s309] sm:$0x1]
    %v312 = vperm.slane %v310, 0
    %v330 = vunpack.c.l.b16 %v293
    %v331 = vunpack.c.l.b16 %v294
    %v332 = vunpack.c.l.b16 %v295
    %v333 = vunpack.c.l.b16 %v296
    %v334 = vunpack.c.l.b16 %v297
    %v335 = vunpack.c.l.b16 %v298
    %v336 = vunpack.c.l.b16 %v299
    %v337 = vunpack.c.l.b16 %v300
    %v338 = vunpack.c.l.b16 %v301
    %v339 = vunpack.c.l.b16 %v302
    %v340 = vunpack.c.l.b16 %v303
    %v341 = vunpack.c.l.b16 %v304
    %v342 = vunpack.c.l.b16 %v305
    %v343 = vunpack.c.l.b16 %v306
    %v344 = vunpack.c.l.b16 %v307
    %v345 = vunpack.c.l.b16 %v308
    %v346 = vpack.c.b16 %v331, %v330
    %v347 = vpack.c.b16 %v333, %v332
    %v348 = vpack.c.b16 %v335, %v334
    %v349 = vpack.c.b16 %v337, %v336
    %v350 = vpack.c.b16 %v339, %v338
    %v351 = vpack.c.b16 %v341, %v340
    %v352 = vpack.c.b16 %v343, %v342
    %v353 = vpack.c.b16 %v345, %v344
    %362 = vmatpush.bf16.msra.mxu0 %v353
    %363 = vmatpush.bf16.msra.mxu0 %v352
    %364 = vmatpush.bf16.msra.mxu0 %v351
    %365 = vmatpush.bf16.msra.mxu0 %v350
    %366 = vmatpush.bf16.msra.mxu0 %v349
    %367 = vmatpush.bf16.msra.mxu0 %v348
    %368 = vmatpush.bf16.msra.mxu0 %v347
    %369 = vmatpush.bf16.msra.mxu0 %v346
    %370 = vmatmul.bf16.gmra.mxu0 %v291
    %v371 = vpop.f32.mrf.mxu0
    %v372 = vadd.f32 %v312, %v371
    %v373 = vpop.f32.mrf.mxu0
    %374 = vdwg.mxu0
    %v375 = vtanh.pop %v372
    %v376 = vpack.c.bf16 %v375, %v375
    %s377 = scalar_lea.vmem [#allocation7], 192
    %v378 = vld [vmem:[%s377] sm:$0xf]
    %v379 = vld [vmem:[%s377 + $0x4] sm:$0xf]
    %v380 = vld [vmem:[%s377 + $0x8] sm:$0xf]
    %v381 = vld [vmem:[%s377 + $0xc] sm:$0xf]
    %v382 = vld [vmem:[%s377 + $0x10] sm:$0xf]
    %v383 = vld [vmem:[%s377 + $0x14] sm:$0xf]
    %v384 = vld [vmem:[%s377 + $0x18] sm:$0xf]
    %v385 = vld [vmem:[%s377 + $0x1c] sm:$0xf]
    %v386 = vld [vmem:[%s377 + $0x20] sm:$0xf]
    %v387 = vld [vmem:[%s377 + $0x24] sm:$0xf]
    %v388 = vld [vmem:[%s377 + $0x28] sm:$0xf]
    %v389 = vld [vmem:[%s377 + $0x2c] sm:$0xf]
    %v390 = vld [vmem:[%s377 + $0x30] sm:$0xf]
    %v391 = vld [vmem:[%s377 + $0x34] sm:$0xf]
    %v392 = vld [vmem:[%s377 + $0x38] sm:$0xf]
    %v393 = vld [vmem:[%s377 + $0x3c] sm:$0xf]
    %s394 = scalar_lea.vmem [#allocation8], 4
    %v395 = vld [vmem:[%s394] sm:$0x1]
    %v397 = vperm.slane %v395, 0
    %v415 = vunpack.c.l.b16 %v378
    %v416 = vunpack.c.l.b16 %v379
    %v417 = vunpack.c.l.b16 %v380
    %v418 = vunpack.c.l.b16 %v381
    %v419 = vunpack.c.l.b16 %v382
    %v420 = vunpack.c.l.b16 %v383
    %v421 = vunpack.c.l.b16 %v384
    %v422 = vunpack.c.l.b16 %v385
    %v423 = vunpack.c.l.b16 %v386
    %v424 = vunpack.c.l.b16 %v387
    %v425 = vunpack.c.l.b16 %v388
    %v426 = vunpack.c.l.b16 %v389
    %v427 = vunpack.c.l.b16 %v390
    %v428 = vunpack.c.l.b16 %v391
    %v429 = vunpack.c.l.b16 %v392
    %v430 = vunpack.c.l.b16 %v393
    %v431 = vpack.c.b16 %v416, %v415
    %v432 = vpack.c.b16 %v418, %v417
    %v433 = vpack.c.b16 %v420, %v419
    %v434 = vpack.c.b16 %v422, %v421
    %v435 = vpack.c.b16 %v424, %v423
    %v436 = vpack.c.b16 %v426, %v425
    %v437 = vpack.c.b16 %v428, %v427
    %v438 = vpack.c.b16 %v430, %v429
    %447 = vmatpush.bf16.msra.mxu0 %v438
    %448 = vmatpush.bf16.msra.mxu0 %v437
    %449 = vmatpush.bf16.msra.mxu0 %v436
    %450 = vmatpush.bf16.msra.mxu0 %v435
    %451 = vmatpush.bf16.msra.mxu0 %v434
    %452 = vmatpush.bf16.msra.mxu0 %v433
    %453 = vmatpush.bf16.msra.mxu0 %v432
    %454 = vmatpush.bf16.msra.mxu0 %v431
    %455 = vmatmul.bf16.gmra.mxu0 %v376
    %v456 = vpop.f32.mrf.mxu0
    %v457 = vadd.f32 %v397, %v456
    %v458 = vpop.f32.mrf.mxu0
    %459 = vdwg.mxu0
    %v460 = vtanh.pop %v457
    %v461 = vpack.c.bf16 %v460, %v460
    %s462 = scalar_lea.vmem [#allocation7], 256
    %v463 = vld [vmem:[%s462] sm:$0xf]
    %v464 = vld [vmem:[%s462 + $0x4] sm:$0xf]
    %v465 = vld [vmem:[%s462 + $0x8] sm:$0xf]
    %v466 = vld [vmem:[%s462 + $0xc] sm:$0xf]
    %v467 = vld [vmem:[%s462 + $0x10] sm:$0xf]
    %v468 = vld [vmem:[%s462 + $0x14] sm:$0xf]
    %v469 = vld [vmem:[%s462 + $0x18] sm:$0xf]
    %v470 = vld [vmem:[%s462 + $0x1c] sm:$0xf]
    %v471 = vld [vmem:[%s462 + $0x20] sm:$0xf]
    %v472 = vld [vmem:[%s462 + $0x24] sm:$0xf]
    %v473 = vld [vmem:[%s462 + $0x28] sm:$0xf]
    %v474 = vld [vmem:[%s462 + $0x2c] sm:$0xf]
    %v475 = vld [vmem:[%s462 + $0x30] sm:$0xf]
    %v476 = vld [vmem:[%s462 + $0x34] sm:$0xf]
    %v477 = vld [vmem:[%s462 + $0x38] sm:$0xf]
    %v478 = vld [vmem:[%s462 + $0x3c] sm:$0xf]
    %s479 = scalar_lea.vmem [#allocation8], 5
    %v480 = vld [vmem:[%s479] sm:$0x1]
    %v482 = vperm.slane %v480, 0
    %v500 = vunpack.c.l.b16 %v463
    %v501 = vunpack.c.l.b16 %v464
    %v502 = vunpack.c.l.b16 %v465
    %v503 = vunpack.c.l.b16 %v466
    %v504 = vunpack.c.l.b16 %v467
    %v505 = vunpack.c.l.b16 %v468
    %v506 = vunpack.c.l.b16 %v469
    %v507 = vunpack.c.l.b16 %v470
    %v508 = vunpack.c.l.b16 %v471
    %v509 = vunpack.c.l.b16 %v472
    %v510 = vunpack.c.l.b16 %v473
    %v511 = vunpack.c.l.b16 %v474
    %v512 = vunpack.c.l.b16 %v475
    %v513 = vunpack.c.l.b16 %v476
    %v514 = vunpack.c.l.b16 %v477
    %v515 = vunpack.c.l.b16 %v478
    %v516 = vpack.c.b16 %v501, %v500
    %v517 = vpack.c.b16 %v503, %v502
    %v518 = vpack.c.b16 %v505, %v504
    %v519 = vpack.c.b16 %v507, %v506
    %v520 = vpack.c.b16 %v509, %v508
    %v521 = vpack.c.b16 %v511, %v510
    %v522 = vpack.c.b16 %v513, %v512
    %v523 = vpack.c.b16 %v515, %v514
    %532 = vmatpush.bf16.msra.mxu0 %v523
    %533 = vmatpush.bf16.msra.mxu0 %v522
    %534 = vmatpush.bf16.msra.mxu0 %v521
    %535 = vmatpush.bf16.msra.mxu0 %v520
    %536 = vmatpush.bf16.msra.mxu0 %v519
    %537 = vmatpush.bf16.msra.mxu0 %v518
    %538 = vmatpush.bf16.msra.mxu0 %v517
    %539 = vmatpush.bf16.msra.mxu0 %v516
    %540 = vmatmul.bf16.gmra.mxu0 %v461
    %v541 = vpop.f32.mrf.mxu0
    %v542 = vadd.f32 %v482, %v541
    %v543 = vpop.f32.mrf.mxu0
    %544 = vdwg.mxu0
    %v545 = vtanh.pop %v542
    %v546 = vpack.c.bf16 %v545, %v545
    %s547 = scalar_lea.vmem [#allocation7], 320
    %v548 = vld [vmem:[%s547] sm:$0xf]
    %v549 = vld [vmem:[%s547 + $0x4] sm:$0xf]
    %v550 = vld [vmem:[%s547 + $0x8] sm:$0xf]
    %v551 = vld [vmem:[%s547 + $0xc] sm:$0xf]
    %v552 = vld [vmem:[%s547 + $0x10] sm:$0xf]
    %v553 = vld [vmem:[%s547 + $0x14] sm:$0xf]
    %v554 = vld [vmem:[%s547 + $0x18] sm:$0xf]
    %v555 = vld [vmem:[%s547 + $0x1c] sm:$0xf]
    %v556 = vld [vmem:[%s547 + $0x20] sm:$0xf]
    %v557 = vld [vmem:[%s547 + $0x24] sm:$0xf]
    %v558 = vld [vmem:[%s547 + $0x28] sm:$0xf]
    %v559 = vld [vmem:[%s547 + $0x2c] sm:$0xf]
    %v560 = vld [vmem:[%s547 + $0x30] sm:$0xf]
    %v561 = vld [vmem:[%s547 + $0x34] sm:$0xf]
    %v562 = vld [vmem:[%s547 + $0x38] sm:$0xf]
    %v563 = vld [vmem:[%s547 + $0x3c] sm:$0xf]
    %s564 = scalar_lea.vmem [#allocation8], 6
    %v565 = vld [vmem:[%s564] sm:$0x1]
    %v567 = vperm.slane %v565, 0
    %v585 = vunpack.c.l.b16 %v548
    %v586 = vunpack.c.l.b16 %v549
    %v587 = vunpack.c.l.b16 %v550
    %v588 = vunpack.c.l.b16 %v551
    %v589 = vunpack.c.l.b16 %v552
    %v590 = vunpack.c.l.b16 %v553
    %v591 = vunpack.c.l.b16 %v554
    %v592 = vunpack.c.l.b16 %v555
    %v593 = vunpack.c.l.b16 %v556
    %v594 = vunpack.c.l.b16 %v557
    %v595 = vunpack.c.l.b16 %v558
    %v596 = vunpack.c.l.b16 %v559
    %v597 = vunpack.c.l.b16 %v560
    %v598 = vunpack.c.l.b16 %v561
    %v599 = vunpack.c.l.b16 %v562
    %v600 = vunpack.c.l.b16 %v563
    %v601 = vpack.c.b16 %v586, %v585
    %v602 = vpack.c.b16 %v588, %v587
    %v603 = vpack.c.b16 %v590, %v589
    %v604 = vpack.c.b16 %v592, %v591
    %v605 = vpack.c.b16 %v594, %v593
    %v606 = vpack.c.b16 %v596, %v595
    %v607 = vpack.c.b16 %v598, %v597
    %v608 = vpack.c.b16 %v600, %v599
    %617 = vmatpush.bf16.msra.mxu0 %v608
    %618 = vmatpush.bf16.msra.mxu0 %v607
    %619 = vmatpush.bf16.msra.mxu0 %v606
    %620 = vmatpush.bf16.msra.mxu0 %v605
    %621 = vmatpush.bf16.msra.mxu0 %v604
    %622 = vmatpush.bf16.msra.mxu0 %v603
    %623 = vmatpush.bf16.msra.mxu0 %v602
    %624 = vmatpush.bf16.msra.mxu0 %v601
    %625 = vmatmul.bf16.gmra.mxu0 %v546
    %v626 = vpop.f32.mrf.mxu0
    %v627 = vadd.f32 %v567, %v626
    %v628 = vpop.f32.mrf.mxu0
    %629 = vdwg.mxu0
    %v630 = vtanh.pop %v627
    %v631 = vpack.c.bf16 %v630, %v630
    %s632 = scalar_lea.vmem [#allocation7], 384
    %v633 = vld [vmem:[%s632] sm:$0xf]
    %v634 = vld [vmem:[%s632 + $0x4] sm:$0xf]
    %v635 = vld [vmem:[%s632 + $0x8] sm:$0xf]
    %v636 = vld [vmem:[%s632 + $0xc] sm:$0xf]
    %v637 = vld [vmem:[%s632 + $0x10] sm:$0xf]
    %v638 = vld [vmem:[%s632 + $0x14] sm:$0xf]
    %v639 = vld [vmem:[%s632 + $0x18] sm:$0xf]
    %v640 = vld [vmem:[%s632 + $0x1c] sm:$0xf]
    %v641 = vld [vmem:[%s632 + $0x20] sm:$0xf]
    %v642 = vld [vmem:[%s632 + $0x24] sm:$0xf]
    %v643 = vld [vmem:[%s632 + $0x28] sm:$0xf]
    %v644 = vld [vmem:[%s632 + $0x2c] sm:$0xf]
    %v645 = vld [vmem:[%s632 + $0x30] sm:$0xf]
    %v646 = vld [vmem:[%s632 + $0x34] sm:$0xf]
    %v647 = vld [vmem:[%s632 + $0x38] sm:$0xf]
    %v648 = vld [vmem:[%s632 + $0x3c] sm:$0xf]
    %s649 = scalar_lea.vmem [#allocation8], 7
    %v650 = vld [vmem:[%s649] sm:$0x1]
    %v652 = vperm.slane %v650, 0
    %v670 = vunpack.c.l.b16 %v633
    %v671 = vunpack.c.l.b16 %v634
    %v672 = vunpack.c.l.b16 %v635
    %v673 = vunpack.c.l.b16 %v636
    %v674 = vunpack.c.l.b16 %v637
    %v675 = vunpack.c.l.b16 %v638
    %v676 = vunpack.c.l.b16 %v639
    %v677 = vunpack.c.l.b16 %v640
    %v678 = vunpack.c.l.b16 %v641
    %v679 = vunpack.c.l.b16 %v642
    %v680 = vunpack.c.l.b16 %v643
    %v681 = vunpack.c.l.b16 %v644
    %v682 = vunpack.c.l.b16 %v645
    %v683 = vunpack.c.l.b16 %v646
    %v684 = vunpack.c.l.b16 %v647
    %v685 = vunpack.c.l.b16 %v648
    %v686 = vpack.c.b16 %v671, %v670
    %v687 = vpack.c.b16 %v673, %v672
    %v688 = vpack.c.b16 %v675, %v674
    %v689 = vpack.c.b16 %v677, %v676
    %v690 = vpack.c.b16 %v679, %v678
    %v691 = vpack.c.b16 %v681, %v680
    %v692 = vpack.c.b16 %v683, %v682
    %v693 = vpack.c.b16 %v685, %v684
    %702 = vmatpush.bf16.msra.mxu0 %v693
    %703 = vmatpush.bf16.msra.mxu0 %v692
    %704 = vmatpush.bf16.msra.mxu0 %v691
    %705 = vmatpush.bf16.msra.mxu0 %v690
    %706 = vmatpush.bf16.msra.mxu0 %v689
    %707 = vmatpush.bf16.msra.mxu0 %v688
    %708 = vmatpush.bf16.msra.mxu0 %v687
    %709 = vmatpush.bf16.msra.mxu0 %v686
    %710 = vmatmul.bf16.gmra.mxu0 %v631
    %v711 = vpop.f32.mrf.mxu0
    %v712 = vadd.f32 %v652, %v711
    %v713 = vpop.f32.mrf.mxu0
    %714 = vdwg.mxu0
    %v715 = vtanh.pop %v712
    %v716 = vpack.c.bf16 %v715, %v715
    %s717 = scalar_lea.vmem [#allocation7], 448
    %v718 = vld [vmem:[%s717] sm:$0xf]
    %v719 = vld [vmem:[%s717 + $0x4] sm:$0xf]
    %v720 = vld [vmem:[%s717 + $0x8] sm:$0xf]
    %v721 = vld [vmem:[%s717 + $0xc] sm:$0xf]
    %v722 = vld [vmem:[%s717 + $0x10] sm:$0xf]
    %v723 = vld [vmem:[%s717 + $0x14] sm:$0xf]
    %v724 = vld [vmem:[%s717 + $0x18] sm:$0xf]
    %v725 = vld [vmem:[%s717 + $0x1c] sm:$0xf]
    %v726 = vld [vmem:[%s717 + $0x20] sm:$0xf]
    %v727 = vld [vmem:[%s717 + $0x24] sm:$0xf]
    %v728 = vld [vmem:[%s717 + $0x28] sm:$0xf]
    %v729 = vld [vmem:[%s717 + $0x2c] sm:$0xf]
    %v730 = vld [vmem:[%s717 + $0x30] sm:$0xf]
    %v731 = vld [vmem:[%s717 + $0x34] sm:$0xf]
    %v732 = vld [vmem:[%s717 + $0x38] sm:$0xf]
    %v733 = vld [vmem:[%s717 + $0x3c] sm:$0xf]
    %s734 = scalar_lea.vmem [#allocation8], 8
    %v735 = vld [vmem:[%s734] sm:$0x1]
    %v737 = vperm.slane %v735, 0
    %v755 = vunpack.c.l.b16 %v718
    %v756 = vunpack.c.l.b16 %v719
    %v757 = vunpack.c.l.b16 %v720
    %v758 = vunpack.c.l.b16 %v721
    %v759 = vunpack.c.l.b16 %v722
    %v760 = vunpack.c.l.b16 %v723
    %v761 = vunpack.c.l.b16 %v724
    %v762 = vunpack.c.l.b16 %v725
    %v763 = vunpack.c.l.b16 %v726
    %v764 = vunpack.c.l.b16 %v727
    %v765 = vunpack.c.l.b16 %v728
    %v766 = vunpack.c.l.b16 %v729
    %v767 = vunpack.c.l.b16 %v730
    %v768 = vunpack.c.l.b16 %v731
    %v769 = vunpack.c.l.b16 %v732
    %v770 = vunpack.c.l.b16 %v733
    %v771 = vpack.c.b16 %v756, %v755
    %v772 = vpack.c.b16 %v758, %v757
    %v773 = vpack.c.b16 %v760, %v759
    %v774 = vpack.c.b16 %v762, %v761
    %v775 = vpack.c.b16 %v764, %v763
    %v776 = vpack.c.b16 %v766, %v765
    %v777 = vpack.c.b16 %v768, %v767
    %v778 = vpack.c.b16 %v770, %v769
    %787 = vmatpush.bf16.msra.mxu0 %v778
    %788 = vmatpush.bf16.msra.mxu0 %v777
    %789 = vmatpush.bf16.msra.mxu0 %v776
    %790 = vmatpush.bf16.msra.mxu0 %v775
    %791 = vmatpush.bf16.msra.mxu0 %v774
    %792 = vmatpush.bf16.msra.mxu0 %v773
    %793 = vmatpush.bf16.msra.mxu0 %v772
    %794 = vmatpush.bf16.msra.mxu0 %v771
    %795 = vmatmul.bf16.gmra.mxu0 %v716
    %v796 = vpop.f32.mrf.mxu0
    %v797 = vadd.f32 %v737, %v796
    %v798 = vpop.f32.mrf.mxu0
    %799 = vdwg.mxu0
    %v800 = vtanh.pop %v797
    %v801 = vpack.c.bf16 %v800, %v800
    %s802 = scalar_lea.vmem [#allocation7], 512
    %v803 = vld [vmem:[%s802] sm:$0xf]
    %v804 = vld [vmem:[%s802 + $0x4] sm:$0xf]
    %v805 = vld [vmem:[%s802 + $0x8] sm:$0xf]
    %v806 = vld [vmem:[%s802 + $0xc] sm:$0xf]
    %v807 = vld [vmem:[%s802 + $0x10] sm:$0xf]
    %v808 = vld [vmem:[%s802 + $0x14] sm:$0xf]
    %v809 = vld [vmem:[%s802 + $0x18] sm:$0xf]
    %v810 = vld [vmem:[%s802 + $0x1c] sm:$0xf]
    %v811 = vld [vmem:[%s802 + $0x20] sm:$0xf]
    %v812 = vld [vmem:[%s802 + $0x24] sm:$0xf]
    %v813 = vld [vmem:[%s802 + $0x28] sm:$0xf]
    %v814 = vld [vmem:[%s802 + $0x2c] sm:$0xf]
    %v815 = vld [vmem:[%s802 + $0x30] sm:$0xf]
    %v816 = vld [vmem:[%s802 + $0x34] sm:$0xf]
    %v817 = vld [vmem:[%s802 + $0x38] sm:$0xf]
    %v818 = vld [vmem:[%s802 + $0x3c] sm:$0xf]
    %s819 = scalar_lea.vmem [#allocation8], 9
    %v820 = vld [vmem:[%s819] sm:$0x1]
    %v822 = vperm.slane %v820, 0
    %v840 = vunpack.c.l.b16 %v803
    %v841 = vunpack.c.l.b16 %v804
    %v842 = vunpack.c.l.b16 %v805
    %v843 = vunpack.c.l.b16 %v806
    %v844 = vunpack.c.l.b16 %v807
    %v845 = vunpack.c.l.b16 %v808
    %v846 = vunpack.c.l.b16 %v809
    %v847 = vunpack.c.l.b16 %v810
    %v848 = vunpack.c.l.b16 %v811
    %v849 = vunpack.c.l.b16 %v812
    %v850 = vunpack.c.l.b16 %v813
    %v851 = vunpack.c.l.b16 %v814
    %v852 = vunpack.c.l.b16 %v815
    %v853 = vunpack.c.l.b16 %v816
    %v854 = vunpack.c.l.b16 %v817
    %v855 = vunpack.c.l.b16 %v818
    %v856 = vpack.c.b16 %v841, %v840
    %v857 = vpack.c.b16 %v843, %v842
    %v858 = vpack.c.b16 %v845, %v844
    %v859 = vpack.c.b16 %v847, %v846
    %v860 = vpack.c.b16 %v849, %v848
    %v861 = vpack.c.b16 %v851, %v850
    %v862 = vpack.c.b16 %v853, %v852
    %v863 = vpack.c.b16 %v855, %v854
    %872 = vmatpush.bf16.msra.mxu0 %v863
    %873 = vmatpush.bf16.msra.mxu0 %v862
    %874 = vmatpush.bf16.msra.mxu0 %v861
    %875 = vmatpush.bf16.msra.mxu0 %v860
    %876 = vmatpush.bf16.msra.mxu0 %v859
    %877 = vmatpush.bf16.msra.mxu0 %v858
    %878 = vmatpush.bf16.msra.mxu0 %v857
    %879 = vmatpush.bf16.msra.mxu0 %v856
    %880 = vmatmul.bf16.gmra.mxu0 %v801
    %v881 = vpop.f32.mrf.mxu0
    %v882 = vadd.f32 %v822, %v881
    %v883 = vpop.f32.mrf.mxu0
    %884 = vdwg.mxu0
    %885 = vst [vmem:[#allocation10] sm:$0xff] %v882
    %v886 = vld [vmem:[#allocation2 + $0x8] sm:$0xff]
    %v887 = vpack.c.bf16 %v886, %v886
    %v888 = vld [vmem:[#allocation5] sm:$0xf]
    %v889 = vld [vmem:[#allocation5 + $0x4] sm:$0xf]
    %v890 = vld [vmem:[#allocation5 + $0x8] sm:$0xf]
    %v891 = vld [vmem:[#allocation5 + $0xc] sm:$0xf]
    %v892 = vld [vmem:[#allocation8] sm:$0x1]
    %v894 = vperm.slane %v892, 0
    %v900 = vunpack.c.l.b16 %v888
    %v901 = vunpack.c.l.b16 %v889
    %v902 = vunpack.c.l.b16 %v890
    %v903 = vunpack.c.l.b16 %v891
    %v904 = vpack.c.b16 %v901, %v900
    %v905 = vpack.c.b16 %v903, %v902
    %v909 = vsel %vm104, %v887, 0
    %911 = vmatpush.bf16.msra.mxu0 0
    %912 = vmatpush.bf16.msra.mxu0 0
    %913 = vmatpush.bf16.msra.mxu0 0
    %914 = vmatpush.bf16.msra.mxu0 0
    %915 = vmatpush.bf16.msra.mxu0 0
    %916 = vmatpush.bf16.msra.mxu0 0
    %917 = vmatpush.bf16.msra.mxu0 %v905
    %918 = vmatpush.bf16.msra.mxu0 %v904
    %919 = vmatmul.bf16.gmra.mxu0 %v909
    %v920 = vpop.f32.mrf.mxu0
    %v921 = vadd.f32 %v894, %v920
    %v922 = vpop.f32.mrf.mxu0
    %923 = vdwg.mxu0
    %v924 = vtanh.pop %v921
    %v925 = vpack.c.bf16 %v924, %v924
    %v926 = vld [vmem:[#allocation7] sm:$0xf]
    %v927 = vld [vmem:[#allocation7 + $0x4] sm:$0xf]
    %v928 = vld [vmem:[#allocation7 + $0x8] sm:$0xf]
    %v929 = vld [vmem:[#allocation7 + $0xc] sm:$0xf]
    %v930 = vld [vmem:[#allocation7 + $0x10] sm:$0xf]
    %v931 = vld [vmem:[#allocation7 + $0x14] sm:$0xf]
    %v932 = vld [vmem:[#allocation7 + $0x18] sm:$0xf]
    %v933 = vld [vmem:[#allocation7 + $0x1c] sm:$0xf]
    %v934 = vld [vmem:[#allocation7 + $0x20] sm:$0xf]
    %v935 = vld [vmem:[#allocation7 + $0x24] sm:$0xf]
    %v936 = vld [vmem:[#allocation7 + $0x28] sm:$0xf]
    %v937 = vld [vmem:[#allocation7 + $0x2c] sm:$0xf]
    %v938 = vld [vmem:[#allocation7 + $0x30] sm:$0xf]
    %v939 = vld [vmem:[#allocation7 + $0x34] sm:$0xf]
    %v940 = vld [vmem:[#allocation7 + $0x38] sm:$0xf]
    %v941 = vld [vmem:[#allocation7 + $0x3c] sm:$0xf]
    %v942 = vld [vmem:[%s139] sm:$0x1]
    %v944 = vperm.slane %v942, 0
    %v962 = vunpack.c.l.b16 %v926
    %v963 = vunpack.c.l.b16 %v927
    %v964 = vunpack.c.l.b16 %v928
    %v965 = vunpack.c.l.b16 %v929
    %v966 = vunpack.c.l.b16 %v930
    %v967 = vunpack.c.l.b16 %v931
    %v968 = vunpack.c.l.b16 %v932
    %v969 = vunpack.c.l.b16 %v933
    %v970 = vunpack.c.l.b16 %v934
    %v971 = vunpack.c.l.b16 %v935
    %v972 = vunpack.c.l.b16 %v936
    %v973 = vunpack.c.l.b16 %v937
    %v974 = vunpack.c.l.b16 %v938
    %v975 = vunpack.c.l.b16 %v939
    %v976 = vunpack.c.l.b16 %v940
    %v977 = vunpack.c.l.b16 %v941
    %v978 = vpack.c.b16 %v963, %v962
    %v979 = vpack.c.b16 %v965, %v964
    %v980 = vpack.c.b16 %v967, %v966
    %v981 = vpack.c.b16 %v969, %v968
    %v982 = vpack.c.b16 %v971, %v970
    %v983 = vpack.c.b16 %v973, %v972
    %v984 = vpack.c.b16 %v975, %v974
    %v985 = vpack.c.b16 %v977, %v976
    %994 = vmatpush.bf16.msra.mxu0 %v985
    %995 = vmatpush.bf16.msra.mxu0 %v984
    %996 = vmatpush.bf16.msra.mxu0 %v983
    %997 = vmatpush.bf16.msra.mxu0 %v982
    %998 = vmatpush.bf16.msra.mxu0 %v981
    %999 = vmatpush.bf16.msra.mxu0 %v980
    %1000 = vmatpush.bf16.msra.mxu0 %v979
    %1001 = vmatpush.bf16.msra.mxu0 %v978
    %1002 = vmatmul.bf16.gmra.mxu0 %v925
    %v1003 = vpop.f32.mrf.mxu0
    %v1004 = vadd.f32 %v944, %v1003
    %v1005 = vpop.f32.mrf.mxu0
    %1006 = vdwg.mxu0
    %v1007 = vtanh.pop %v1004
    %v1008 = vpack.c.bf16 %v1007, %v1007
    %v1009 = vld [vmem:[%s207] sm:$0xf]
    %v1010 = vld [vmem:[%s207 + $0x4] sm:$0xf]
    %v1011 = vld [vmem:[%s207 + $0x8] sm:$0xf]
    %v1012 = vld [vmem:[%s207 + $0xc] sm:$0xf]
    %v1013 = vld [vmem:[%s207 + $0x10] sm:$0xf]
    %v1014 = vld [vmem:[%s207 + $0x14] sm:$0xf]
    %v1015 = vld [vmem:[%s207 + $0x18] sm:$0xf]
    %v1016 = vld [vmem:[%s207 + $0x1c] sm:$0xf]
    %v1017 = vld [vmem:[%s207 + $0x20] sm:$0xf]
    %v1018 = vld [vmem:[%s207 + $0x24] sm:$0xf]
    %v1019 = vld [vmem:[%s207 + $0x28] sm:$0xf]
    %v1020 = vld [vmem:[%s207 + $0x2c] sm:$0xf]
    %v1021 = vld [vmem:[%s207 + $0x30] sm:$0xf]
    %v1022 = vld [vmem:[%s207 + $0x34] sm:$0xf]
    %v1023 = vld [vmem:[%s207 + $0x38] sm:$0xf]
    %v1024 = vld [vmem:[%s207 + $0x3c] sm:$0xf]
    %v1025 = vld [vmem:[%s224] sm:$0x1]
    %v1027 = vperm.slane %v1025, 0
    %v1045 = vunpack.c.l.b16 %v1009
    %v1046 = vunpack.c.l.b16 %v1010
    %v1047 = vunpack.c.l.b16 %v1011
    %v1048 = vunpack.c.l.b16 %v1012
    %v1049 = vunpack.c.l.b16 %v1013
    %v1050 = vunpack.c.l.b16 %v1014
    %v1051 = vunpack.c.l.b16 %v1015
    %v1052 = vunpack.c.l.b16 %v1016
    %v1053 = vunpack.c.l.b16 %v1017
    %v1054 = vunpack.c.l.b16 %v1018
    %v1055 = vunpack.c.l.b16 %v1019
    %v1056 = vunpack.c.l.b16 %v1020
    %v1057 = vunpack.c.l.b16 %v1021
    %v1058 = vunpack.c.l.b16 %v1022
    %v1059 = vunpack.c.l.b16 %v1023
    %v1060 = vunpack.c.l.b16 %v1024
    %v1061 = vpack.c.b16 %v1046, %v1045
    %v1062 = vpack.c.b16 %v1048, %v1047
    %v1063 = vpack.c.b16 %v1050, %v1049
    %v1064 = vpack.c.b16 %v1052, %v1051
    %v1065 = vpack.c.b16 %v1054, %v1053
    %v1066 = vpack.c.b16 %v1056, %v1055
    %v1067 = vpack.c.b16 %v1058, %v1057
    %v1068 = vpack.c.b16 %v1060, %v1059
    %1077 = vmatpush.bf16.msra.mxu0 %v1068
    %1078 = vmatpush.bf16.msra.mxu0 %v1067
    %1079 = vmatpush.bf16.msra.mxu0 %v1066
    %1080 = vmatpush.bf16.msra.mxu0 %v1065
    %1081 = vmatpush.bf16.msra.mxu0 %v1064
    %1082 = vmatpush.bf16.msra.mxu0 %v1063
    %1083 = vmatpush.bf16.msra.mxu0 %v1062
    %1084 = vmatpush.bf16.msra.mxu0 %v1061
    %1085 = vmatmul.bf16.gmra.mxu0 %v1008
    %v1086 = vpop.f32.mrf.mxu0
    %v1087 = vadd.f32 %v1027, %v1086
    %v1088 = vpop.f32.mrf.mxu0
    %1089 = vdwg.mxu0
    %v1090 = vtanh.pop %v1087
    %v1091 = vpack.c.bf16 %v1090, %v1090
    %v1092 = vld [vmem:[%s292] sm:$0xf]
    %v1093 = vld [vmem:[%s292 + $0x4] sm:$0xf]
    %v1094 = vld [vmem:[%s292 + $0x8] sm:$0xf]
    %v1095 = vld [vmem:[%s292 + $0xc] sm:$0xf]
    %v1096 = vld [vmem:[%s292 + $0x10] sm:$0xf]
    %v1097 = vld [vmem:[%s292 + $0x14] sm:$0xf]
    %v1098 = vld [vmem:[%s292 + $0x18] sm:$0xf]
    %v1099 = vld [vmem:[%s292 + $0x1c] sm:$0xf]
    %v1100 = vld [vmem:[%s292 + $0x20] sm:$0xf]
    %v1101 = vld [vmem:[%s292 + $0x24] sm:$0xf]
    %v1102 = vld [vmem:[%s292 + $0x28] sm:$0xf]
    %v1103 = vld [vmem:[%s292 + $0x2c] sm:$0xf]
    %v1104 = vld [vmem:[%s292 + $0x30] sm:$0xf]
    %v1105 = vld [vmem:[%s292 + $0x34] sm:$0xf]
    %v1106 = vld [vmem:[%s292 + $0x38] sm:$0xf]
    %v1107 = vld [vmem:[%s292 + $0x3c] sm:$0xf]
    %v1108 = vld [vmem:[%s309] sm:$0x1]
    %v1110 = vperm.slane %v1108, 0
    %v1128 = vunpack.c.l.b16 %v1092
    %v1129 = vunpack.c.l.b16 %v1093
    %v1130 = vunpack.c.l.b16 %v1094
    %v1131 = vunpack.c.l.b16 %v1095
    %v1132 = vunpack.c.l.b16 %v1096
    %v1133 = vunpack.c.l.b16 %v1097
    %v1134 = vunpack.c.l.b16 %v1098
    %v1135 = vunpack.c.l.b16 %v1099
    %v1136 = vunpack.c.l.b16 %v1100
    %v1137 = vunpack.c.l.b16 %v1101
    %v1138 = vunpack.c.l.b16 %v1102
    %v1139 = vunpack.c.l.b16 %v1103
    %v1140 = vunpack.c.l.b16 %v1104
    %v1141 = vunpack.c.l.b16 %v1105
    %v1142 = vunpack.c.l.b16 %v1106
    %v1143 = vunpack.c.l.b16 %v1107
    %v1144 = vpack.c.b16 %v1129, %v1128
    %v1145 = vpack.c.b16 %v1131, %v1130
    %v1146 = vpack.c.b16 %v1133, %v1132
    %v1147 = vpack.c.b16 %v1135, %v1134
    %v1148 = vpack.c.b16 %v1137, %v1136
    %v1149 = vpack.c.b16 %v1139, %v1138
    %v1150 = vpack.c.b16 %v1141, %v1140
    %v1151 = vpack.c.b16 %v1143, %v1142
    %1160 = vmatpush.bf16.msra.mxu0 %v1151
    %1161 = vmatpush.bf16.msra.mxu0 %v1150
    %1162 = vmatpush.bf16.msra.mxu0 %v1149
    %1163 = vmatpush.bf16.msra.mxu0 %v1148
    %1164 = vmatpush.bf16.msra.mxu0 %v1147
    %1165 = vmatpush.bf16.msra.mxu0 %v1146
    %1166 = vmatpush.bf16.msra.mxu0 %v1145
    %1167 = vmatpush.bf16.msra.mxu0 %v1144
    %1168 = vmatmul.bf16.gmra.mxu0 %v1091
    %v1169 = vpop.f32.mrf.mxu0
    %v1170 = vadd.f32 %v1110, %v1169
    %v1171 = vpop.f32.mrf.mxu0
    %1172 = vdwg.mxu0
    %v1173 = vtanh.pop %v1170
    %v1174 = vpack.c.bf16 %v1173, %v1173
    %v1175 = vld [vmem:[%s377] sm:$0xf]
    %v1176 = vld [vmem:[%s377 + $0x4] sm:$0xf]
    %v1177 = vld [vmem:[%s377 + $0x8] sm:$0xf]
    %v1178 = vld [vmem:[%s377 + $0xc] sm:$0xf]
    %v1179 = vld [vmem:[%s377 + $0x10] sm:$0xf]
    %v1180 = vld [vmem:[%s377 + $0x14] sm:$0xf]
    %v1181 = vld [vmem:[%s377 + $0x18] sm:$0xf]
    %v1182 = vld [vmem:[%s377 + $0x1c] sm:$0xf]
    %v1183 = vld [vmem:[%s377 + $0x20] sm:$0xf]
    %v1184 = vld [vmem:[%s377 + $0x24] sm:$0xf]
    %v1185 = vld [vmem:[%s377 + $0x28] sm:$0xf]
    %v1186 = vld [vmem:[%s377 + $0x2c] sm:$0xf]
    %v1187 = vld [vmem:[%s377 + $0x30] sm:$0xf]
    %v1188 = vld [vmem:[%s377 + $0x34] sm:$0xf]
    %v1189 = vld [vmem:[%s377 + $0x38] sm:$0xf]
    %v1190 = vld [vmem:[%s377 + $0x3c] sm:$0xf]
    %v1191 = vld [vmem:[%s394] sm:$0x1]
    %v1193 = vperm.slane %v1191, 0
    %v1211 = vunpack.c.l.b16 %v1175
    %v1212 = vunpack.c.l.b16 %v1176
    %v1213 = vunpack.c.l.b16 %v1177
    %v1214 = vunpack.c.l.b16 %v1178
    %v1215 = vunpack.c.l.b16 %v1179
    %v1216 = vunpack.c.l.b16 %v1180
    %v1217 = vunpack.c.l.b16 %v1181
    %v1218 = vunpack.c.l.b16 %v1182
    %v1219 = vunpack.c.l.b16 %v1183
    %v1220 = vunpack.c.l.b16 %v1184
    %v1221 = vunpack.c.l.b16 %v1185
    %v1222 = vunpack.c.l.b16 %v1186
    %v1223 = vunpack.c.l.b16 %v1187
    %v1224 = vunpack.c.l.b16 %v1188
    %v1225 = vunpack.c.l.b16 %v1189
    %v1226 = vunpack.c.l.b16 %v1190
    %v1227 = vpack.c.b16 %v1212, %v1211
    %v1228 = vpack.c.b16 %v1214, %v1213
    %v1229 = vpack.c.b16 %v1216, %v1215
    %v1230 = vpack.c.b16 %v1218, %v1217
    %v1231 = vpack.c.b16 %v1220, %v1219
    %v1232 = vpack.c.b16 %v1222, %v1221
    %v1233 = vpack.c.b16 %v1224, %v1223
    %v1234 = vpack.c.b16 %v1226, %v1225
    %1243 = vmatpush.bf16.msra.mxu0 %v1234
    %1244 = vmatpush.bf16.msra.mxu0 %v1233
    %1245 = vmatpush.bf16.msra.mxu0 %v1232
    %1246 = vmatpush.bf16.msra.mxu0 %v1231
    %1247 = vmatpush.bf16.msra.mxu0 %v1230
    %1248 = vmatpush.bf16.msra.mxu0 %v1229
    %1249 = vmatpush.bf16.msra.mxu0 %v1228
    %1250 = vmatpush.bf16.msra.mxu0 %v1227
    %1251 = vmatmul.bf16.gmra.mxu0 %v1174
    %v1252 = vpop.f32.mrf.mxu0
    %v1253 = vadd.f32 %v1193, %v1252
    %v1254 = vpop.f32.mrf.mxu0
    %1255 = vdwg.mxu0
    %v1256 = vtanh.pop %v1253
    %v1257 = vpack.c.bf16 %v1256, %v1256
    %v1258 = vld [vmem:[%s462] sm:$0xf]
    %v1259 = vld [vmem:[%s462 + $0x4] sm:$0xf]
    %v1260 = vld [vmem:[%s462 + $0x8] sm:$0xf]
    %v1261 = vld [vmem:[%s462 + $0xc] sm:$0xf]
    %v1262 = vld [vmem:[%s462 + $0x10] sm:$0xf]
    %v1263 = vld [vmem:[%s462 + $0x14] sm:$0xf]
    %v1264 = vld [vmem:[%s462 + $0x18] sm:$0xf]
    %v1265 = vld [vmem:[%s462 + $0x1c] sm:$0xf]
    %v1266 = vld [vmem:[%s462 + $0x20] sm:$0xf]
    %v1267 = vld [vmem:[%s462 + $0x24] sm:$0xf]
    %v1268 = vld [vmem:[%s462 + $0x28] sm:$0xf]
    %v1269 = vld [vmem:[%s462 + $0x2c] sm:$0xf]
    %v1270 = vld [vmem:[%s462 + $0x30] sm:$0xf]
    %v1271 = vld [vmem:[%s462 + $0x34] sm:$0xf]
    %v1272 = vld [vmem:[%s462 + $0x38] sm:$0xf]
    %v1273 = vld [vmem:[%s462 + $0x3c] sm:$0xf]
    %v1274 = vld [vmem:[%s479] sm:$0x1]
    %v1276 = vperm.slane %v1274, 0
    %v1294 = vunpack.c.l.b16 %v1258
    %v1295 = vunpack.c.l.b16 %v1259
    %v1296 = vunpack.c.l.b16 %v1260
    %v1297 = vunpack.c.l.b16 %v1261
    %v1298 = vunpack.c.l.b16 %v1262
    %v1299 = vunpack.c.l.b16 %v1263
    %v1300 = vunpack.c.l.b16 %v1264
    %v1301 = vunpack.c.l.b16 %v1265
    %v1302 = vunpack.c.l.b16 %v1266
    %v1303 = vunpack.c.l.b16 %v1267
    %v1304 = vunpack.c.l.b16 %v1268
    %v1305 = vunpack.c.l.b16 %v1269
    %v1306 = vunpack.c.l.b16 %v1270
    %v1307 = vunpack.c.l.b16 %v1271
    %v1308 = vunpack.c.l.b16 %v1272
    %v1309 = vunpack.c.l.b16 %v1273
    %v1310 = vpack.c.b16 %v1295, %v1294
    %v1311 = vpack.c.b16 %v1297, %v1296
    %v1312 = vpack.c.b16 %v1299, %v1298
    %v1313 = vpack.c.b16 %v1301, %v1300
    %v1314 = vpack.c.b16 %v1303, %v1302
    %v1315 = vpack.c.b16 %v1305, %v1304
    %v1316 = vpack.c.b16 %v1307, %v1306
    %v1317 = vpack.c.b16 %v1309, %v1308
    %1326 = vmatpush.bf16.msra.mxu0 %v1317
    %1327 = vmatpush.bf16.msra.mxu0 %v1316
    %1328 = vmatpush.bf16.msra.mxu0 %v1315
    %1329 = vmatpush.bf16.msra.mxu0 %v1314
    %1330 = vmatpush.bf16.msra.mxu0 %v1313
    %1331 = vmatpush.bf16.msra.mxu0 %v1312
    %1332 = vmatpush.bf16.msra.mxu0 %v1311
    %1333 = vmatpush.bf16.msra.mxu0 %v1310
    %1334 = vmatmul.bf16.gmra.mxu0 %v1257
    %v1335 = vpop.f32.mrf.mxu0
    %v1336 = vadd.f32 %v1276, %v1335
    %v1337 = vpop.f32.mrf.mxu0
    %1338 = vdwg.mxu0
    %v1339 = vtanh.pop %v1336
    %v1340 = vpack.c.bf16 %v1339, %v1339
    %v1341 = vld [vmem:[%s547] sm:$0xf]
    %v1342 = vld [vmem:[%s547 + $0x4] sm:$0xf]
    %v1343 = vld [vmem:[%s547 + $0x8] sm:$0xf]
    %v1344 = vld [vmem:[%s547 + $0xc] sm:$0xf]
    %v1345 = vld [vmem:[%s547 + $0x10] sm:$0xf]
    %v1346 = vld [vmem:[%s547 + $0x14] sm:$0xf]
    %v1347 = vld [vmem:[%s547 + $0x18] sm:$0xf]
    %v1348 = vld [vmem:[%s547 + $0x1c] sm:$0xf]
    %v1349 = vld [vmem:[%s547 + $0x20] sm:$0xf]
    %v1350 = vld [vmem:[%s547 + $0x24] sm:$0xf]
    %v1351 = vld [vmem:[%s547 + $0x28] sm:$0xf]
    %v1352 = vld [vmem:[%s547 + $0x2c] sm:$0xf]
    %v1353 = vld [vmem:[%s547 + $0x30] sm:$0xf]
    %v1354 = vld [vmem:[%s547 + $0x34] sm:$0xf]
    %v1355 = vld [vmem:[%s547 + $0x38] sm:$0xf]
    %v1356 = vld [vmem:[%s547 + $0x3c] sm:$0xf]
    %v1357 = vld [vmem:[%s564] sm:$0x1]
    %v1359 = vperm.slane %v1357, 0
    %v1377 = vunpack.c.l.b16 %v1341
    %v1378 = vunpack.c.l.b16 %v1342
    %v1379 = vunpack.c.l.b16 %v1343
    %v1380 = vunpack.c.l.b16 %v1344
    %v1381 = vunpack.c.l.b16 %v1345
    %v1382 = vunpack.c.l.b16 %v1346
    %v1383 = vunpack.c.l.b16 %v1347
    %v1384 = vunpack.c.l.b16 %v1348
    %v1385 = vunpack.c.l.b16 %v1349
    %v1386 = vunpack.c.l.b16 %v1350
    %v1387 = vunpack.c.l.b16 %v1351
    %v1388 = vunpack.c.l.b16 %v1352
    %v1389 = vunpack.c.l.b16 %v1353
    %v1390 = vunpack.c.l.b16 %v1354
    %v1391 = vunpack.c.l.b16 %v1355
    %v1392 = vunpack.c.l.b16 %v1356
    %v1393 = vpack.c.b16 %v1378, %v1377
    %v1394 = vpack.c.b16 %v1380, %v1379
    %v1395 = vpack.c.b16 %v1382, %v1381
    %v1396 = vpack.c.b16 %v1384, %v1383
    %v1397 = vpack.c.b16 %v1386, %v1385
    %v1398 = vpack.c.b16 %v1388, %v1387
    %v1399 = vpack.c.b16 %v1390, %v1389
    %v1400 = vpack.c.b16 %v1392, %v1391
    %1409 = vmatpush.bf16.msra.mxu0 %v1400
    %1410 = vmatpush.bf16.msra.mxu0 %v1399
    %1411 = vmatpush.bf16.msra.mxu0 %v1398
    %1412 = vmatpush.bf16.msra.mxu0 %v1397
    %1413 = vmatpush.bf16.msra.mxu0 %v1396
    %1414 = vmatpush.bf16.msra.mxu0 %v1395
    %1415 = vmatpush.bf16.msra.mxu0 %v1394
    %1416 = vmatpush.bf16.msra.mxu0 %v1393
    %1417 = vmatmul.bf16.gmra.mxu0 %v1340
    %v1418 = vpop.f32.mrf.mxu0
    %v1419 = vadd.f32 %v1359, %v1418
    %v1420 = vpop.f32.mrf.mxu0
    %1421 = vdwg.mxu0
    %v1422 = vtanh.pop %v1419
    %v1423 = vpack.c.bf16 %v1422, %v1422
    %v1424 = vld [vmem:[%s632] sm:$0xf]
    %v1425 = vld [vmem:[%s632 + $0x4] sm:$0xf]
    %v1426 = vld [vmem:[%s632 + $0x8] sm:$0xf]
    %v1427 = vld [vmem:[%s632 + $0xc] sm:$0xf]
    %v1428 = vld [vmem:[%s632 + $0x10] sm:$0xf]
    %v1429 = vld [vmem:[%s632 + $0x14] sm:$0xf]
    %v1430 = vld [vmem:[%s632 + $0x18] sm:$0xf]
    %v1431 = vld [vmem:[%s632 + $0x1c] sm:$0xf]
    %v1432 = vld [vmem:[%s632 + $0x20] sm:$0xf]
    %v1433 = vld [vmem:[%s632 + $0x24] sm:$0xf]
    %v1434 = vld [vmem:[%s632 + $0x28] sm:$0xf]
    %v1435 = vld [vmem:[%s632 + $0x2c] sm:$0xf]
    %v1436 = vld [vmem:[%s632 + $0x30] sm:$0xf]
    %v1437 = vld [vmem:[%s632 + $0x34] sm:$0xf]
    %v1438 = vld [vmem:[%s632 + $0x38] sm:$0xf]
    %v1439 = vld [vmem:[%s632 + $0x3c] sm:$0xf]
    %v1440 = vld [vmem:[%s649] sm:$0x1]
    %v1442 = vperm.slane %v1440, 0
    %v1460 = vunpack.c.l.b16 %v1424
    %v1461 = vunpack.c.l.b16 %v1425
    %v1462 = vunpack.c.l.b16 %v1426
    %v1463 = vunpack.c.l.b16 %v1427
    %v1464 = vunpack.c.l.b16 %v1428
    %v1465 = vunpack.c.l.b16 %v1429
    %v1466 = vunpack.c.l.b16 %v1430
    %v1467 = vunpack.c.l.b16 %v1431
    %v1468 = vunpack.c.l.b16 %v1432
    %v1469 = vunpack.c.l.b16 %v1433
    %v1470 = vunpack.c.l.b16 %v1434
    %v1471 = vunpack.c.l.b16 %v1435
    %v1472 = vunpack.c.l.b16 %v1436
    %v1473 = vunpack.c.l.b16 %v1437
    %v1474 = vunpack.c.l.b16 %v1438
    %v1475 = vunpack.c.l.b16 %v1439
    %v1476 = vpack.c.b16 %v1461, %v1460
    %v1477 = vpack.c.b16 %v1463, %v1462
    %v1478 = vpack.c.b16 %v1465, %v1464
    %v1479 = vpack.c.b16 %v1467, %v1466
    %v1480 = vpack.c.b16 %v1469, %v1468
    %v1481 = vpack.c.b16 %v1471, %v1470
    %v1482 = vpack.c.b16 %v1473, %v1472
    %v1483 = vpack.c.b16 %v1475, %v1474
    %1492 = vmatpush.bf16.msra.mxu0 %v1483
    %1493 = vmatpush.bf16.msra.mxu0 %v1482
    %1494 = vmatpush.bf16.msra.mxu0 %v1481
    %1495 = vmatpush.bf16.msra.mxu0 %v1480
    %1496 = vmatpush.bf16.msra.mxu0 %v1479
    %1497 = vmatpush.bf16.msra.mxu0 %v1478
    %1498 = vmatpush.bf16.msra.mxu0 %v1477
    %1499 = vmatpush.bf16.msra.mxu0 %v1476
    %1500 = vmatmul.bf16.gmra.mxu0 %v1423
    %v1501 = vpop.f32.mrf.mxu0
    %v1502 = vadd.f32 %v1442, %v1501
    %v1503 = vpop.f32.mrf.mxu0
    %1504 = vdwg.mxu0
    %v1505 = vtanh.pop %v1502
    %v1506 = vpack.c.bf16 %v1505, %v1505
    %v1507 = vld [vmem:[%s717] sm:$0xf]
    %v1508 = vld [vmem:[%s717 + $0x4] sm:$0xf]
    %v1509 = vld [vmem:[%s717 + $0x8] sm:$0xf]
    %v1510 = vld [vmem:[%s717 + $0xc] sm:$0xf]
    %v1511 = vld [vmem:[%s717 + $0x10] sm:$0xf]
    %v1512 = vld [vmem:[%s717 + $0x14] sm:$0xf]
    %v1513 = vld [vmem:[%s717 + $0x18] sm:$0xf]
    %v1514 = vld [vmem:[%s717 + $0x1c] sm:$0xf]
    %v1515 = vld [vmem:[%s717 + $0x20] sm:$0xf]
    %v1516 = vld [vmem:[%s717 + $0x24] sm:$0xf]
    %v1517 = vld [vmem:[%s717 + $0x28] sm:$0xf]
    %v1518 = vld [vmem:[%s717 + $0x2c] sm:$0xf]
    %v1519 = vld [vmem:[%s717 + $0x30] sm:$0xf]
    %v1520 = vld [vmem:[%s717 + $0x34] sm:$0xf]
    %v1521 = vld [vmem:[%s717 + $0x38] sm:$0xf]
    %v1522 = vld [vmem:[%s717 + $0x3c] sm:$0xf]
    %v1523 = vld [vmem:[%s734] sm:$0x1]
    %v1525 = vperm.slane %v1523, 0
    %v1543 = vunpack.c.l.b16 %v1507
    %v1544 = vunpack.c.l.b16 %v1508
    %v1545 = vunpack.c.l.b16 %v1509
    %v1546 = vunpack.c.l.b16 %v1510
    %v1547 = vunpack.c.l.b16 %v1511
    %v1548 = vunpack.c.l.b16 %v1512
    %v1549 = vunpack.c.l.b16 %v1513
    %v1550 = vunpack.c.l.b16 %v1514
    %v1551 = vunpack.c.l.b16 %v1515
    %v1552 = vunpack.c.l.b16 %v1516
    %v1553 = vunpack.c.l.b16 %v1517
    %v1554 = vunpack.c.l.b16 %v1518
    %v1555 = vunpack.c.l.b16 %v1519
    %v1556 = vunpack.c.l.b16 %v1520
    %v1557 = vunpack.c.l.b16 %v1521
    %v1558 = vunpack.c.l.b16 %v1522
    %v1559 = vpack.c.b16 %v1544, %v1543
    %v1560 = vpack.c.b16 %v1546, %v1545
    %v1561 = vpack.c.b16 %v1548, %v1547
    %v1562 = vpack.c.b16 %v1550, %v1549
    %v1563 = vpack.c.b16 %v1552, %v1551
    %v1564 = vpack.c.b16 %v1554, %v1553
    %v1565 = vpack.c.b16 %v1556, %v1555
    %v1566 = vpack.c.b16 %v1558, %v1557
    %1575 = vmatpush.bf16.msra.mxu0 %v1566
    %1576 = vmatpush.bf16.msra.mxu0 %v1565
    %1577 = vmatpush.bf16.msra.mxu0 %v1564
    %1578 = vmatpush.bf16.msra.mxu0 %v1563
    %1579 = vmatpush.bf16.msra.mxu0 %v1562
    %1580 = vmatpush.bf16.msra.mxu0 %v1561
    %1581 = vmatpush.bf16.msra.mxu0 %v1560
    %1582 = vmatpush.bf16.msra.mxu0 %v1559
    %1583 = vmatmul.bf16.gmra.mxu0 %v1506
    %v1584 = vpop.f32.mrf.mxu0
    %v1585 = vadd.f32 %v1525, %v1584
    %v1586 = vpop.f32.mrf.mxu0
    %1587 = vdwg.mxu0
    %v1588 = vtanh.pop %v1585
    %v1589 = vpack.c.bf16 %v1588, %v1588
    %v1590 = vld [vmem:[%s802] sm:$0xf]
    %v1591 = vld [vmem:[%s802 + $0x4] sm:$0xf]
    %v1592 = vld [vmem:[%s802 + $0x8] sm:$0xf]
    %v1593 = vld [vmem:[%s802 + $0xc] sm:$0xf]
    %v1594 = vld [vmem:[%s802 + $0x10] sm:$0xf]
    %v1595 = vld [vmem:[%s802 + $0x14] sm:$0xf]
    %v1596 = vld [vmem:[%s802 + $0x18] sm:$0xf]
    %v1597 = vld [vmem:[%s802 + $0x1c] sm:$0xf]
    %v1598 = vld [vmem:[%s802 + $0x20] sm:$0xf]
    %v1599 = vld [vmem:[%s802 + $0x24] sm:$0xf]
    %v1600 = vld [vmem:[%s802 + $0x28] sm:$0xf]
    %v1601 = vld [vmem:[%s802 + $0x2c] sm:$0xf]
    %v1602 = vld [vmem:[%s802 + $0x30] sm:$0xf]
    %v1603 = vld [vmem:[%s802 + $0x34] sm:$0xf]
    %v1604 = vld [vmem:[%s802 + $0x38] sm:$0xf]
    %v1605 = vld [vmem:[%s802 + $0x3c] sm:$0xf]
    %v1606 = vld [vmem:[%s819] sm:$0x1]
    %v1608 = vperm.slane %v1606, 0
    %v1626 = vunpack.c.l.b16 %v1590
    %v1627 = vunpack.c.l.b16 %v1591
    %v1628 = vunpack.c.l.b16 %v1592
    %v1629 = vunpack.c.l.b16 %v1593
    %v1630 = vunpack.c.l.b16 %v1594
    %v1631 = vunpack.c.l.b16 %v1595
    %v1632 = vunpack.c.l.b16 %v1596
    %v1633 = vunpack.c.l.b16 %v1597
    %v1634 = vunpack.c.l.b16 %v1598
    %v1635 = vunpack.c.l.b16 %v1599
    %v1636 = vunpack.c.l.b16 %v1600
    %v1637 = vunpack.c.l.b16 %v1601
    %v1638 = vunpack.c.l.b16 %v1602
    %v1639 = vunpack.c.l.b16 %v1603
    %v1640 = vunpack.c.l.b16 %v1604
    %v1641 = vunpack.c.l.b16 %v1605
    %v1642 = vpack.c.b16 %v1627, %v1626
    %v1643 = vpack.c.b16 %v1629, %v1628
    %v1644 = vpack.c.b16 %v1631, %v1630
    %v1645 = vpack.c.b16 %v1633, %v1632
    %v1646 = vpack.c.b16 %v1635, %v1634
    %v1647 = vpack.c.b16 %v1637, %v1636
    %v1648 = vpack.c.b16 %v1639, %v1638
    %v1649 = vpack.c.b16 %v1641, %v1640
    %1658 = vmatpush.bf16.msra.mxu0 %v1649
    %1659 = vmatpush.bf16.msra.mxu0 %v1648
    %1660 = vmatpush.bf16.msra.mxu0 %v1647
    %1661 = vmatpush.bf16.msra.mxu0 %v1646
    %1662 = vmatpush.bf16.msra.mxu0 %v1645
    %1663 = vmatpush.bf16.msra.mxu0 %v1644
    %1664 = vmatpush.bf16.msra.mxu0 %v1643
    %1665 = vmatpush.bf16.msra.mxu0 %v1642
    %1666 = vmatmul.bf16.gmra.mxu0 %v1589
    %v1667 = vpop.f32.mrf.mxu0
    %v1668 = vadd.f32 %v1608, %v1667
    %v1669 = vpop.f32.mrf.mxu0
    %1670 = vdwg.mxu0
    %1671 = vst [vmem:[#allocation10 + $0x8] sm:$0xff] %v1668
    // Predicated region
    $region34: #{tpu_custom_call.1} parent=1 // pred_check
      _
    $region35: #{tpu_custom_call.1} parent=1 // pred_check_branch
      %1673 = sbr.rel (0) target = $region37
    $region36: #{tpu_custom_call.1} parent=1 // pred_region
      %1675 = vsyncadd [#allocation4], 0
      %s1676 = sshll.u32 [#allocation10], 4
      %s1677 = int_to_ptr.vmem [resolvable:$true] %s1676
      %s1678 = sshll.u32 %s4, 4
      %s1679 = int_to_ptr.hbm [resolvable:$true] %s1678
      %1684 = dma.vmem_to_hbm [thread:$0]  %s1677, 256, %s1679, [#allocation4], 128, 128, 8
    $region37: #{tpu_custom_call.1} parent=1 // pred_fallthru
      _
    // Predicated region
    $region38: #{tpu_custom_call.1} parent=1 // pred_check
      _
    $region39: #{tpu_custom_call.1} parent=1 // pred_check_branch
      %1686 = sbr.rel (0) target = $region41
    $region40: #{tpu_custom_call.1} parent=1 // pred_region
      %1688 = dma.done [#allocation4], 256
    $region41: #{tpu_custom_call.1} parent=1 // pred_fallthru
      _
    %1689 = vsyncpa [#allocation3], 1
    %1690 = vsyncpa [#allocation6], 1
    %1691 = vsyncpa [#allocation9], 1
    %1692 = vsyncpa [#allocation4], 1

</llo_original>
